<compile_context>
chip_gen: v6e
topology: v6e:2x2x1
jax: 0.10.0
libtpu: 0.0.40
codegen_flags: <defaults>
</compile_context>

<pallas_src>
import math

import jax
import jax.numpy as jnp
import numpy as np
from jax.experimental import pallas as pl
from jax.experimental.pallas import tpu as pltpu


# -----------------------------------------------------------------------------
# Hash-grid encoder (torch-ngp style 'hashgrid') -- plain JAX glue,
# feature-major output [L*F, N] with no per-level transposes.
# -----------------------------------------------------------------------------
def make_resolutions(num_levels, base_resolution, desired_resolution):
    if num_levels == 1:
        return [base_resolution]
    per_level_scale = math.exp(
        (math.log(desired_resolution) - math.log(base_resolution)) / (num_levels - 1)
    )
    return [int(math.floor(base_resolution * (per_level_scale ** l)))
            for l in range(num_levels)]


def hash_encode_fm(x, embeddings_t, resolutions, hashmap_size,
                   out_dtype=jnp.bfloat16):
    """Multiresolution hash-grid encoding, emitted feature-major.

    x: [N, 3] in [-1, 1].  embeddings_t: [L, F, T] (feature-major table,
    typically bf16).  Returns [L*F, N] in out_dtype."""
    n = x.shape[0]
    f = embeddings_t.shape[1]
    x01 = jnp.clip((x + 1.0) * 0.5, 0.0, 1.0)
    p0 = jnp.uint32(1)
    p1 = jnp.uint32(2654435761)
    p2 = jnp.uint32(805459861)
    feats = []
    for l, res in enumerate(resolutions):
        pos = x01 * (res - 1)
        pos_floor = jnp.floor(pos)
        w = pos - pos_floor                       # [N, 3] trilinear weights
        c0 = pos_floor.astype(jnp.int32)          # [N, 3] base corner
        table_l = embeddings_t[l]                 # [F, T]
        acc = jnp.zeros((f, n), jnp.float32)
        for cx in (0, 1):
            for cy in (0, 1):
                for cz in (0, 1):
                    offs = jnp.array([cx, cy, cz], dtype=jnp.int32)
                    corner = jnp.clip(c0 + offs, 0, res - 1).astype(jnp.uint32)
                    idx = (corner[:, 0] * p0) ^ (corner[:, 1] * p1) ^ (corner[:, 2] * p2)
                    idx = (idx % jnp.uint32(hashmap_size)).astype(jnp.int32)
                    sel = jnp.array([cx, cy, cz], dtype=bool)
                    wt = jnp.prod(jnp.where(sel, w, 1.0 - w), axis=-1)     # [N]
                    gathered = jnp.take(table_l, idx, axis=1)              # [F, N]
                    acc = acc + wt[None, :] * gathered
        feats.append(acc)                                                  # [F, N]
    return jnp.concatenate(feats, axis=0).astype(out_dtype)                # [L*F, N]


# -----------------------------------------------------------------------------
# Pallas kernel: fused feature-major MLP (+ optional bias/clip/sphere post-proc)
# -----------------------------------------------------------------------------
def make_mlp_kernel(num_layers, use_bias_last, clip_sdf,
                    use_sphere_post_processing, sphere_radius, sphere_scale,
                    compute_dtype):
    def kernel(*refs):
        enc_ref = refs[0]
        w_refs = refs[1:1 + num_layers]
        idx = 1 + num_layers
        b_ref = None
        if use_bias_last:
            b_ref = refs[idx]
            idx += 1
        out_ref = refs[idx]

        h = enc_ref[...]                       # [in_dim, tile_n] compute_dtype
        for l in range(num_layers):
            # Feature-major: [out_l, in_l] @ [in_l, tile_n] -> [out_l, tile_n]
            # MXU streaming dim = tile_n, f32 accumulation.
            h = jnp.dot(w_refs[l][...], h, preferred_element_type=jnp.float32)
            if l == num_layers - 1:
                if use_bias_last:
                    h = h + b_ref[0, 0]        # SMEM scalar broadcast
            else:
                h = jnp.maximum(h, 0.0).astype(compute_dtype)
        if clip_sdf is not None:
            h = jnp.clip(h, -clip_sdf, clip_sdf)
        if use_sphere_post_processing:
            eps = 1e-8
            h = jnp.sign(h) * jnp.sqrt(jnp.abs(h) + eps)
            h = (h - sphere_radius) * sphere_scale
        out_ref[...] = h.astype(out_ref.dtype)  # (1, tile_n): lane-dense store
    return kernel


def sdf_mlp_pallas(enc_fm, weights, bias_last, *, clip_sdf=None,
                   use_sphere_post_processing=False, sphere_radius=1.6,
                   sphere_scale=1.0, tile_n=8192,
                   compute_dtype=jnp.bfloat16,
                   vmem_limit_bytes=48 * 1024 * 1024):
    """enc_fm: [in_dim, N_pad] feature-major encoding.
    weights[l]: [out_l, in_l] (torch nn.Linear layout, ideally already bf16).
    bias_last: scalar / [1,1] or None.  Returns [out_dim, N_pad] f32."""
    in_dim, n_pad = enc_fm.shape
    assert tile_n % 128 == 0 and n_pad % tile_n == 0, (tile_n, n_pad)
    num_layers = len(weights)
    use_bias_last = bias_last is not None
    out_dim = weights[-1].shape[0]

    args = [enc_fm.astype(compute_dtype)]
    in_specs = [pl.BlockSpec((in_dim, tile_n), lambda i: (0, i))]
    for w in weights:
        args.append(jnp.asarray(w, compute_dtype))
        # Whole weight resident in VMEM, fetched once (no double buffering).
        in_specs.append(pl.BlockSpec(memory_space=pltpu.MemorySpace.VMEM))
    if use_bias_last:
        # (1,1) scalar in SMEM: no VMEM load / lane broadcast per grid step.
        args.append(jnp.asarray(bias_last, jnp.float32).reshape(1, 1))
        in_specs.append(pl.BlockSpec(memory_space=pltpu.MemorySpace.SMEM))

    kernel = make_mlp_kernel(num_layers, use_bias_last, clip_sdf,
                             use_sphere_post_processing, sphere_radius,
                             sphere_scale, compute_dtype)

    return pl.pallas_call(
        kernel,
        out_shape=jax.ShapeDtypeStruct((out_dim, n_pad), jnp.float32),
        grid=(n_pad // tile_n,),
        in_specs=in_specs,
        out_specs=pl.BlockSpec((out_dim, tile_n), lambda i: (0, i)),
        compiler_params=pltpu.CompilerParams(
            dimension_semantics=("parallel",),
            vmem_limit_bytes=vmem_limit_bytes),
    )(*args)


# -----------------------------------------------------------------------------
# SDFNetwork forward (defaults: num_layers=3, hidden=64, skips=[], no clip,
# use_sphere_post_processing=False).  skips != [] is not supported here.
# -----------------------------------------------------------------------------
def _round_up(a, b):
    return -(-a // b) * b


def _choose_tile(n, tile_n):
    """Lane-aligned tile; aim for >= 2 grid steps so both v7x TensorCores
    get work, capped at tile_n to bound per-step VMEM."""
    half = _round_up(max(1, -(-n // 2)), 128)
    return max(128, min(tile_n, half))


def sdf_network_forward(x, params, cfg, *, tile_n=8192,
                        compute_dtype=jnp.bfloat16):
    """x: [N, 3] in [-1, 1].  Returns SDF values [N, 1] (f32)."""
    n = x.shape[0]
    tile = _choose_tile(n, tile_n)
    n_pad = _round_up(n, tile)
    if n_pad != n:
        # pad the (cheap) points, never the encoding.
        x = jnp.pad(x, ((0, n_pad - n), (0, 0)))
    enc_fm = hash_encode_fm(x, params["embeddings_t"], cfg["resolutions"],
                            cfg["hashmap_size"], out_dtype=compute_dtype)
    out = sdf_mlp_pallas(
        enc_fm, params["weights"], params.get("bias_last"),
        clip_sdf=cfg["clip_sdf"],
        use_sphere_post_processing=cfg["use_sphere_post_processing"],
        sphere_radius=cfg["sphere_radius"],
        sphere_scale=cfg["sphere_scale"],
        tile_n=tile, compute_dtype=compute_dtype)
    return out[0, :n][:, None]


# -----------------------------------------------------------------------------
# Pure-JAX reference mirroring the kernel math (bf16 operands, f32 accumulate)
# -----------------------------------------------------------------------------
def sdf_mlp_reference(enc_fm, weights, bias_last, cfg,
                      compute_dtype=jnp.bfloat16):
    h = enc_fm.astype(compute_dtype)
    for l, w in enumerate(weights):
        h = jnp.dot(jnp.asarray(w, compute_dtype), h,
                    preferred_element_type=jnp.float32)
        if l == len(weights) - 1:
            if bias_last is not None:
                h = h + jnp.asarray(bias_last, jnp.float32).reshape(1, 1)
        else:
            h = jnp.maximum(h, 0.0).astype(compute_dtype)
    if cfg["clip_sdf"] is not None:
        h = jnp.clip(h, -cfg["clip_sdf"], cfg["clip_sdf"])
    if cfg["use_sphere_post_processing"]:
        h = jnp.sign(h) * jnp.sqrt(jnp.abs(h) + 1e-8)
        h = (h - cfg["sphere_radius"]) * cfg["sphere_scale"]
    return h   # [1, N_pad]


if __name__ == "__main__":
    # --- config (module defaults, small hashmap for the synthetic demo) ------
    num_layers = 3
    hidden_dim = 64
    num_levels = 8
    level_dim = 2
    base_resolution = 16
    desired_resolution = 2048
    hashmap_size = 1 << 14
    in_dim = num_levels * level_dim          # 16
    cfg = dict(
        resolutions=make_resolutions(num_levels, base_resolution,
                                     desired_resolution),
        hashmap_size=hashmap_size,
        clip_sdf=None,
        use_sphere_post_processing=False,
        sphere_radius=1.6,
        sphere_scale=1.0,
    )

    # --- deterministic parameter init ----------------------------------------
    key = jax.random.PRNGKey(0)
    k_emb, k_w0, k_w1, k_w2, k_x = jax.random.split(key, 5)
    embeddings = jax.random.uniform(
        k_emb, (num_levels, hashmap_size, level_dim),
        minval=-1e-4, maxval=1e-4, dtype=jnp.float32)
    # Persistent bf16, feature-major table [L, F, T] (one-time conversion).
    embeddings_t = jnp.transpose(embeddings, (0, 2, 1)).astype(jnp.bfloat16)

    def linear_init(k, fan_in, fan_out):
        bound = 1.0 / math.sqrt(fan_in)
        # torch nn.Linear layout: [out, in]; stored persistently in bf16.
        return jax.random.uniform(k, (fan_out, fan_in),
                                  minval=-bound, maxval=bound,
                                  dtype=jnp.float32).astype(jnp.bfloat16)

    weights = [
        linear_init(k_w0, in_dim, hidden_dim),       # [64, 16]
        linear_init(k_w1, hidden_dim, hidden_dim),   # [64, 64]
        linear_init(k_w2, hidden_dim, 1),            # [1, 64]
    ]
    params = dict(embeddings_t=embeddings_t, weights=weights, bias_last=None)

    # --- example input: N 3D points in [-1, 1]^3 ------------------------------
    N = 4096
    x = jax.random.uniform(k_x, (N, 3), minval=-1.0, maxval=1.0,
                           dtype=jnp.float32)

    fwd = jax.jit(lambda xx: sdf_network_forward(xx, params, cfg))
    out = jax.block_until_ready(fwd(x))
    assert out.shape == (N, 1), out.shape

    # --- correctness: Pallas MLP vs pure-JAX mirror (same bf16 operands) -----
    enc_fm = hash_encode_fm(x, embeddings_t, cfg["resolutions"], hashmap_size,
                            out_dtype=jnp.bfloat16)   # N is tile-aligned here
    ref = sdf_mlp_reference(enc_fm, weights, None, cfg)
    np.testing.assert_allclose(np.asarray(out),
                               np.asarray(ref[0, :N][:, None]),
                               rtol=2e-3, atol=1e-6)

    # --- also exercise the bias / clip / sphere post-processing code paths ---
    cfg2 = dict(cfg, clip_sdf=10.0, use_sphere_post_processing=True)
    params2 = dict(params, bias_last=jnp.full((1, 1), 0.25, jnp.float32))
    fwd2 = jax.jit(lambda xx: sdf_network_forward(xx, params2, cfg2))
    out2 = jax.block_until_ready(fwd2(x))
    ref2 = sdf_mlp_reference(enc_fm, weights, params2["bias_last"], cfg2)
    np.testing.assert_allclose(np.asarray(out2),
                               np.asarray(ref2[0, :N][:, None]),
                               rtol=2e-3, atol=1e-6)

    print("KERNEL_OK")
</pallas_src>

<mosaic_0001>
module attributes {stable_mosaic.version = 11 : i64} {
  func.func @kernel(%arg0: i32, %arg1: memref<16x2048xbf16, #tpu.memory_space<vmem>>, %arg2: memref<64x16xbf16, #tpu.memory_space<vmem>>, %arg3: memref<64x64xbf16, #tpu.memory_space<vmem>>, %arg4: memref<1x64xbf16, #tpu.memory_space<vmem>>, %arg5: memref<1x2048xf32, #tpu.memory_space<vmem>>) attributes {dimension_semantics = [#tpu.dimension_semantics<parallel>], iteration_bounds = array<i64: 2>, scalar_prefetch = 0 : i64, scratch_operands = 0 : i64, tpu.core_type = #tpu.core_type<tc>, window_params = [{transform_indices = @transform_0, window_bounds = array<i64: 16, 2048>}, {pipeline_mode = #tpu.pipeline_mode<synchronous>, transform_indices = @transform_1, window_bounds = array<i64: 64, 16>}, {pipeline_mode = #tpu.pipeline_mode<synchronous>, transform_indices = @transform_2, window_bounds = array<i64: 64, 64>}, {pipeline_mode = #tpu.pipeline_mode<synchronous>, transform_indices = @transform_3, window_bounds = array<i64: 1, 64>}, {transform_indices = @transform_4, window_bounds = array<i64: 1, 2048>}]} {
    %c0 = arith.constant 0 : index
    %c0_0 = arith.constant 0 : index
    %0 = vector.load %arg1[%c0, %c0_0] : memref<16x2048xbf16, #tpu.memory_space<vmem>>, vector<16x2048xbf16>
    %c0_1 = arith.constant 0 : index
    %c0_2 = arith.constant 0 : index
    %1 = vector.load %arg2[%c0_1, %c0_2] : memref<64x16xbf16, #tpu.memory_space<vmem>>, vector<64x16xbf16>
    %cst = arith.constant dense<0.000000e+00> : vector<64x2048xf32>
    %2 = tpu.matmul %1, %0, %cst {dimension_numbers = #tpu.dot_dimension_numbers<[1], [0], [0], [1], [0, 0, 1, 1], [], []>} : vector<64x16xbf16>, vector<16x2048xbf16>, vector<64x2048xf32> -> vector<64x2048xf32>
    %cst_3 = arith.constant 0.000000e+00 : f32
    %3 = vector.broadcast %cst_3 : f32 to vector<64x2048xf32>
    %4 = arith.maximumf %2, %3 : vector<64x2048xf32>
    %5 = arith.truncf %4 : vector<64x2048xf32> to vector<64x2048xbf16>
    %c0_4 = arith.constant 0 : index
    %c0_5 = arith.constant 0 : index
    %6 = vector.load %arg3[%c0_4, %c0_5] : memref<64x64xbf16, #tpu.memory_space<vmem>>, vector<64x64xbf16>
    %cst_6 = arith.constant dense<0.000000e+00> : vector<64x2048xf32>
    %7 = tpu.matmul %6, %5, %cst_6 {dimension_numbers = #tpu.dot_dimension_numbers<[1], [0], [0], [1], [0, 0, 1, 1], [], []>} : vector<64x64xbf16>, vector<64x2048xbf16>, vector<64x2048xf32> -> vector<64x2048xf32>
    %cst_7 = arith.constant 0.000000e+00 : f32
    %8 = vector.broadcast %cst_7 : f32 to vector<64x2048xf32>
    %9 = arith.maximumf %7, %8 : vector<64x2048xf32>
    %10 = arith.truncf %9 : vector<64x2048xf32> to vector<64x2048xbf16>
    %c0_8 = arith.constant 0 : index
    %c0_9 = arith.constant 0 : index
    %11 = vector.load %arg4[%c0_8, %c0_9] : memref<1x64xbf16, #tpu.memory_space<vmem>>, vector<1x64xbf16>
    %cst_10 = arith.constant dense<0.000000e+00> : vector<1x2048xf32>
    %12 = tpu.matmul %11, %10, %cst_10 {dimension_numbers = #tpu.dot_dimension_numbers<[1], [0], [0], [1], [0, 0, 1, 1], [], []>} : vector<1x64xbf16>, vector<64x2048xbf16>, vector<1x2048xf32> -> vector<1x2048xf32>
    %c0_11 = arith.constant 0 : index
    %c0_12 = arith.constant 0 : index
    %13 = vector.load %arg5[%c0_11, %c0_12] : memref<1x2048xf32, #tpu.memory_space<vmem>>, vector<1x2048xf32>
    tpu.vector_store %arg5[%c0_11, %c0_12], %12 {strides = array<i32>} : memref<1x2048xf32, #tpu.memory_space<vmem>>, vector<1x2048xf32>,
    return
  }
  func.func @transform_0(%arg0: i32) -> (i32, i32) {
    %c0_i32 = arith.constant 0 : i32
    %c0_i32_0 = arith.constant 0 : i32
    return %c0_i32, %arg0 : i32, i32
  }
  func.func @transform_1(%arg0: i32) -> (i32, i32) {
    %c0_i32 = arith.constant 0 : i32
    %c0_i32_0 = arith.constant 0 : i32
    %c0_i32_1 = arith.constant 0 : i32
    return %c0_i32, %c0_i32_0 : i32, i32
  }
  func.func @transform_2(%arg0: i32) -> (i32, i32) {
    %c0_i32 = arith.constant 0 : i32
    %c0_i32_0 = arith.constant 0 : i32
    %c0_i32_1 = arith.constant 0 : i32
    return %c0_i32, %c0_i32_0 : i32, i32
  }
  func.func @transform_3(%arg0: i32) -> (i32, i32) {
    %c0_i32 = arith.constant 0 : i32
    %c0_i32_0 = arith.constant 0 : i32
    %c0_i32_1 = arith.constant 0 : i32
    return %c0_i32, %c0_i32_0 : i32, i32
  }
  func.func @transform_4(%arg0: i32) -> (i32, i32) {
    %c0_i32 = arith.constant 0 : i32
    %c0_i32_0 = arith.constant 0 : i32
    return %c0_i32, %arg0 : i32, i32
  }
}

</mosaic_0001>

<llo_original>
// kernel: _lambda_.1
$region0: #{_lambda_.1}
  #allocation0 [shape = 'u32[]', space=smem, size = 0x4, offset = 0x4, fixed_abs, tag = 'smem constant byte address 0x4 - core index']
  #allocation1 [shape = 'u32[144,128]{1,0:T(1,128)}', space=vmem, size = 0x12000, scoped, tag = 'internal scratch']
  %s0 = inlined_call_operand.vmem [shape: bf16[16,4096], index: 0, kind: input, shape index: {}]
  %s1 = inlined_call_operand.vmem [shape: bf16[64,16], index: 1, kind: input, shape index: {}]
  %s2 = inlined_call_operand.vmem [shape: bf16[64,64], index: 2, kind: input, shape index: {}]
  %s3 = inlined_call_operand.vmem [shape: bf16[1,64], index: 3, kind: input, shape index: {}]
  %s4 = inlined_call_operand.hbm [shape: f32[1,4096], index: 4, kind: output, shape index: {}]
  %s5 = sld [smem:[#allocation0]]
  $region72: #{_lambda_.1} parent=0
    _
  %s7 = ssub.s32 1, %s5
  %s8 = scalar_select 0, %s7, %s5
  $region1: #{_lambda_.1} parent=0
    #allocation2 [shape = 'u8[131072]{0}', space=vmem, size = 0x20000, scoped, tag = 'input window, operand 0']
    #allocation3 [shape = 'u8[16384]{0}', space=vmem, size = 0x4000, scoped, tag = 'output window, operand 0']
    #allocation4 [shape = 's32[2]{0}', space=sflag, size = 0x8, scoped, tag = 'scoped memory for _lambda_.1']
    %9 = vsyncpa [#allocation4], 0
    %s10 = scalar_lea.sflag [#allocation4], 1
    %11 = vsyncpa %s10, 0
    loop: start=0, step=1, limit=4
    $region2: #{_lambda_.1} parent=1 // loop_pre_header
      _
    $region3: #{_lambda_.1} parent=1 // loop_header
      %s13 = sphi 0, %s17
      %p14 = scmp.ge.s32.totalorder %s13, 4
      %s23 = sphi 0, %s25
      %s26 = sphi 0, %s23
      %s27 = sphi 0, %s26
      %s43 = sphi 0, %s27
      %s47 = sphi 0, %s47
      %s49 = sphi 0, %s47
      %s50 = sphi 0, %s49
      %s64 = sphi 0, %s50
      %s68 = sphi 0, %s68
      %s70 = sphi 0, %s68
      %s71 = sphi 0, %s70
      %s85 = sphi 0, %s71
      %s89 = sphi 0, %s89
      %s91 = sphi 0, %s89
      %s92 = sphi 0, %s91
      %s106 = sphi 0, %s92
      %s112 = sphi 0, %s114
      %s115 = sphi 0, %s112
      %s116 = sphi 0, %s115
      %s132 = sphi 0, %s116
    $region4: #{_lambda_.1} parent=1 // loop_header_branch
      %16 = sbr.rel (%p14) target = $region8
    $region5: #{_lambda_.1} parent=1 // loop_body
      %s18 = ssub.s32 %s13, 1
      %s19 = ssub.s32 %s13, 2
      %s20 = sadd.s32 %s13, 1
      %s21 = ssub.s32 %s13, %s20
      %p22 = scmp.eq.s32.totalorder %s21, 0
      %s24 = sadd.s32 %s23, 1
      %s25 = scalar_select %p22, %s23, %s24
      %p28 = pneg %p22
      %p29 = scmp.eq.s32.totalorder %s13, 1
      %p30 = por %p28, %p29
      %p31 = scmp.ne.s32.totalorder %s23, %s26
      %p32 = scmp.eq.s32.totalorder %s13, 0
      %p33 = por %p31, %p32
      %p34 = scmp.ne.s32.totalorder %s23, %s26
      %p35 = scmp.eq.s32.totalorder %s18, 1
      %p36 = por %p34, %p35
      %p37 = scmp.ne.s32.totalorder %s26, %s27
      %p38 = scmp.eq.s32.totalorder %s18, 0
      %p39 = por %p37, %p38
      %p40 = scmp.ne.s32.totalorder %s26, %s27
      %p41 = scmp.eq.s32.totalorder %s19, 1
      %p42 = por %p40, %p41
      %p44 = scmp.ne.s32.totalorder %s27, %s43
      %p45 = scmp.eq.s32.totalorder %s19, 0
      %p46 = por %p44, %p45
      %s48 = sadd.s32 %s47, 1
      %p51 = scmp.eq.s32.totalorder %s13, 1
      %p52 = scmp.ne.s32.totalorder %s47, %s49
      %p53 = scmp.eq.s32.totalorder %s13, 0
      %p54 = por %p52, %p53
      %p55 = scmp.ne.s32.totalorder %s47, %s49
      %p56 = scmp.eq.s32.totalorder %s18, 1
      %p57 = por %p55, %p56
      %p58 = scmp.ne.s32.totalorder %s49, %s50
      %p59 = scmp.eq.s32.totalorder %s18, 0
      %p60 = por %p58, %p59
      %p61 = scmp.ne.s32.totalorder %s49, %s50
      %p62 = scmp.eq.s32.totalorder %s19, 1
      %p63 = por %p61, %p62
      %p65 = scmp.ne.s32.totalorder %s50, %s64
      %p66 = scmp.eq.s32.totalorder %s19, 0
      %p67 = por %p65, %p66
      %s69 = sadd.s32 %s68, 1
      %p72 = scmp.eq.s32.totalorder %s13, 1
      %p73 = scmp.ne.s32.totalorder %s68, %s70
      %p74 = scmp.eq.s32.totalorder %s13, 0
      %p75 = por %p73, %p74
      %p76 = scmp.ne.s32.totalorder %s68, %s70
      %p77 = scmp.eq.s32.totalorder %s18, 1
      %p78 = por %p76, %p77
      %p79 = scmp.ne.s32.totalorder %s70, %s71
      %p80 = scmp.eq.s32.totalorder %s18, 0
      %p81 = por %p79, %p80
      %p82 = scmp.ne.s32.totalorder %s70, %s71
      %p83 = scmp.eq.s32.totalorder %s19, 1
      %p84 = por %p82, %p83
      %p86 = scmp.ne.s32.totalorder %s71, %s85
      %p87 = scmp.eq.s32.totalorder %s19, 0
      %p88 = por %p86, %p87
      %s90 = sadd.s32 %s89, 1
      %p93 = scmp.eq.s32.totalorder %s13, 1
      %p94 = scmp.ne.s32.totalorder %s89, %s91
      %p95 = scmp.eq.s32.totalorder %s13, 0
      %p96 = por %p94, %p95
      %p97 = scmp.ne.s32.totalorder %s89, %s91
      %p98 = scmp.eq.s32.totalorder %s18, 1
      %p99 = por %p97, %p98
      %p100 = scmp.ne.s32.totalorder %s91, %s92
      %p101 = scmp.eq.s32.totalorder %s18, 0
      %p102 = por %p100, %p101
      %p103 = scmp.ne.s32.totalorder %s91, %s92
      %p104 = scmp.eq.s32.totalorder %s19, 1
      %p105 = por %p103, %p104
      %p107 = scmp.ne.s32.totalorder %s92, %s106
      %p108 = scmp.eq.s32.totalorder %s19, 0
      %p109 = por %p107, %p108
      %s110 = ssub.s32 %s13, %s20
      %p111 = scmp.eq.s32.totalorder %s110, 0
      %s113 = sadd.s32 %s112, 1
      %s114 = scalar_select %p111, %s112, %s113
      %p117 = pneg %p111
      %p118 = scmp.eq.s32.totalorder %s13, 1
      %p119 = por %p117, %p118
      %p120 = scmp.ne.s32.totalorder %s112, %s115
      %p121 = scmp.eq.s32.totalorder %s13, 0
      %p122 = por %p120, %p121
      %p123 = scmp.ne.s32.totalorder %s112, %s115
      %p124 = scmp.eq.s32.totalorder %s18, 1
      %p125 = por %p123, %p124
      %p126 = scmp.ne.s32.totalorder %s115, %s116
      %p127 = scmp.eq.s32.totalorder %s18, 0
      %p128 = por %p126, %p127
      %p129 = scmp.ne.s32.totalorder %s115, %s116
      %p130 = scmp.eq.s32.totalorder %s19, 1
      %p131 = por %p129, %p130
      %p133 = scmp.ne.s32.totalorder %s116, %s132
      %p134 = scmp.eq.s32.totalorder %s19, 0
      %p135 = por %p133, %p134
      %p136 = scmp.le.s32.totalorder 1, %s13
      %p137 = scmp.lt.s32.totalorder %s13, 3
      %p138 = pnand %p136, %p137
      %p139 = pneg %p138
      // Predicated region
      $region9: #{_lambda_.1} parent=5 // pred_check
        _
      $region10: #{_lambda_.1} parent=5 // pred_check_branch
        %141 = sbr.rel (%p138) target = $region12
      $region11: #{_lambda_.1} parent=5 // pred_region
        %s142 = ssub.s32 %s13, 1
        // Predicated region
        $region13: #{_lambda_.1} parent=11 // pred_check
          %p143 = pneg %p60
        $region14: #{_lambda_.1} parent=11 // pred_check_branch
          %145 = sbr.rel (%p143) target = $region16
        $region15: #{_lambda_.1} parent=11 // pred_region
          _
        $region16: #{_lambda_.1} parent=11 // pred_fallthru
          _
        // Predicated region
        $region17: #{_lambda_.1} parent=11 // pred_check
          %p146 = pneg %p81
        $region18: #{_lambda_.1} parent=11 // pred_check_branch
          %148 = sbr.rel (%p146) target = $region20
        $region19: #{_lambda_.1} parent=11 // pred_region
          _
        $region20: #{_lambda_.1} parent=11 // pred_fallthru
          _
        // Predicated region
        $region21: #{_lambda_.1} parent=11 // pred_check
          %p149 = pneg %p102
        $region22: #{_lambda_.1} parent=11 // pred_check_branch
          %151 = sbr.rel (%p149) target = $region24
        $region23: #{_lambda_.1} parent=11 // pred_region
          _
        $region24: #{_lambda_.1} parent=11 // pred_fallthru
          _
      $region12: #{_lambda_.1} parent=5 // pred_fallthru
        _
      %p152 = scmp.lt.s32.totalorder %s13, 2
      // Predicated region
      $region25: #{_lambda_.1} parent=5 // pred_check
        %p153 = pneg %p152
      $region26: #{_lambda_.1} parent=5 // pred_check_branch
        %155 = sbr.rel (%p153) target = $region28
      $region27: #{_lambda_.1} parent=5 // pred_region
        // Predicated region
        $region29: #{_lambda_.1} parent=27 // pred_check
          %p156 = pneg %p33
        $region30: #{_lambda_.1} parent=27 // pred_check_branch
          %158 = sbr.rel (%p156) target = $region32
        $region31: #{_lambda_.1} parent=27 // pred_region
          %s159 = sand.u32 %s23, 1
          %s160 = sand.u32 %s23, 1
          %s161 = smul.addr %s160, 128
          %s162 = scalar_lea.vmem [#allocation2], %s161
          %s163 = smul.u32 16, %s13
          %s164 = smul.addr %s163, 4
          %s165 = scalar_lea.vmem %s0, %s164
          // Predicated region
          $region33: #{_lambda_.1} parent=31 // pred_check
            _
          $region34: #{_lambda_.1} parent=31 // pred_check_branch
            %167 = sbr.rel (0) target = $region36
          $region35: #{_lambda_.1} parent=31 // pred_region
            // Predicated region
            $region37: #{_lambda_.1} parent=35 // pred_check
              _
            $region38: #{_lambda_.1} parent=35 // pred_check_branch
              %169 = sbr.rel (0) target = $region40
            $region39: #{_lambda_.1} parent=35 // pred_region
              loop: start=0, step=1, limit=1
              $region41: #{_lambda_.1} parent=39 // loop_pre_header
                _
              $region42: #{_lambda_.1} parent=39 // loop_header
                %s171 = sphi 0, %s175
                %p172 = scmp.ge.s32.totalorder %s171, 1
                %s176 = sphi %s165, %s165
                %s177 = sphi %s162, %s162
              $region43: #{_lambda_.1} parent=39 // loop_header_branch
                %174 = sbr.rel (%p172) target = $region47
              $region44: #{_lambda_.1} parent=39 // loop_body
                %v178 = vld [vmem:[%s176] sm:$0xff]
                %179 = vst [vmem:[%s177] sm:$0xff] %v178
                %v180 = vld [vmem:[%s176 + $0x8] sm:$0xff]
                %181 = vst [vmem:[%s177 + $0x8] sm:$0xff] %v180
                %v182 = vld [vmem:[%s176 + $0x10] sm:$0xff]
                %183 = vst [vmem:[%s177 + $0x10] sm:$0xff] %v182
                %v184 = vld [vmem:[%s176 + $0x18] sm:$0xff]
                %185 = vst [vmem:[%s177 + $0x18] sm:$0xff] %v184
                %v186 = vld [vmem:[%s176 + $0x20] sm:$0xff]
                %187 = vst [vmem:[%s177 + $0x20] sm:$0xff] %v186
                %v188 = vld [vmem:[%s176 + $0x28] sm:$0xff]
                %189 = vst [vmem:[%s177 + $0x28] sm:$0xff] %v188
                %v190 = vld [vmem:[%s176 + $0x30] sm:$0xff]
                %191 = vst [vmem:[%s177 + $0x30] sm:$0xff] %v190
                %v192 = vld [vmem:[%s176 + $0x38] sm:$0xff]
                %193 = vst [vmem:[%s177 + $0x38] sm:$0xff] %v192
                %v194 = vld [vmem:[%s176 + $0x80] sm:$0xff]
                %195 = vst [vmem:[%s177 + $0x40] sm:$0xff] %v194
                %v196 = vld [vmem:[%s176 + $0x88] sm:$0xff]
                %197 = vst [vmem:[%s177 + $0x48] sm:$0xff] %v196
                %v198 = vld [vmem:[%s176 + $0x90] sm:$0xff]
                %199 = vst [vmem:[%s177 + $0x50] sm:$0xff] %v198
                %v200 = vld [vmem:[%s176 + $0x98] sm:$0xff]
                %201 = vst [vmem:[%s177 + $0x58] sm:$0xff] %v200
                %v202 = vld [vmem:[%s176 + $0xa0] sm:$0xff]
                %203 = vst [vmem:[%s177 + $0x60] sm:$0xff] %v202
                %v204 = vld [vmem:[%s176 + $0xa8] sm:$0xff]
                %205 = vst [vmem:[%s177 + $0x68] sm:$0xff] %v204
                %v206 = vld [vmem:[%s176 + $0xb0] sm:$0xff]
                %207 = vst [vmem:[%s177 + $0x70] sm:$0xff] %v206
                %v208 = vld [vmem:[%s176 + $0xb8] sm:$0xff]
                %209 = vst [vmem:[%s177 + $0x78] sm:$0xff] %v208
              $region45: #{_lambda_.1} parent=39 // loop_footer
                %s175 = sadd.s32 1, %s171
              $region46: #{_lambda_.1} parent=39 // loop_footer_branch
                %170 = sbr.rel target = $region42
              $region47: #{_lambda_.1} parent=39 // loop_exit
                _
            $region40: #{_lambda_.1} parent=35 // pred_fallthru
              _
            // Predicated region
            $region48: #{_lambda_.1} parent=35 // pred_check
              _
            $region49: #{_lambda_.1} parent=35 // pred_check_branch
              %211 = sbr.rel target = $region51
            $region50: #{_lambda_.1} parent=35 // pred_region
              _
            $region51: #{_lambda_.1} parent=35 // pred_fallthru
              _
          $region36: #{_lambda_.1} parent=31 // pred_fallthru
            _
          %212 = vnop
        $region32: #{_lambda_.1} parent=27 // pred_fallthru
          _
      $region28: #{_lambda_.1} parent=5 // pred_fallthru
        _
      %p213 = scmp.le.s32.totalorder 1, %s13
      %p214 = scmp.lt.s32.totalorder %s13, 3
      %p215 = pnand %p213, %p214
      %p216 = pneg %p215
      // Predicated region
      $region52: #{_lambda_.1} parent=5 // pred_check
        _
      $region53: #{_lambda_.1} parent=5 // pred_check_branch
        %218 = sbr.rel (%p215) target = $region55
      $region54: #{_lambda_.1} parent=5 // pred_region
        %s219 = ssub.s32 %s13, 1
        %s220 = sand.u32 %s26, 1
        %s221 = sand.u32 %s26, 1
        %s222 = smul.addr %s221, 128
        %s223 = scalar_lea.vmem [#allocation2], %s222
        // Predicated region
        $region56: #{_lambda_.1} parent=54 // pred_check
          %p224 = pneg %p39
        $region57: #{_lambda_.1} parent=54 // pred_check_branch
          %226 = sbr.rel (%p224) target = $region59
        $region58: #{_lambda_.1} parent=54 // pred_region
          _
        $region59: #{_lambda_.1} parent=54 // pred_fallthru
          _
        %s227 = sand.u32 %s26, 1
        %s228 = sand.u32 %s26, 1
        %s229 = smul.addr %s228, 128
        %s230 = scalar_lea.vmem [#allocation2], %s229
        %p231 = pneg %p39
        %p232 = pneg %p36
        %p233 = pneg %p60
        %p234 = pneg %p57
        %p235 = pneg %p81
        %p236 = pneg %p78
        %p237 = pneg %p102
        %p238 = pneg %p99
        %p239 = pneg %p128
        %p240 = pneg %p125
        %s241 = sand.u32 %s115, 1
        %s242 = scalar_lea.sflag [#allocation4], %s241
        %s243 = sand.u32 %s115, 1
        %s244 = smul.addr %s243, 16
        %s245 = scalar_lea.vmem [#allocation3], %s244
        %s246 = smul.u32 16, %s18
        %s247 = smul.u32 16, %s18
        %v249 = vld [vmem:[%s223] sm:$0xff]
        %v250 = vld [vmem:[%s223 + $0x8] sm:$0xff]
        %v251 = vld [vmem:[%s223 + $0x10] sm:$0xff]
        %v252 = vld [vmem:[%s223 + $0x18] sm:$0xff]
        %v253 = vld [vmem:[%s223 + $0x20] sm:$0xff]
        %v254 = vld [vmem:[%s223 + $0x28] sm:$0xff]
        %v255 = vld [vmem:[%s223 + $0x30] sm:$0xff]
        %v256 = vld [vmem:[%s223 + $0x38] sm:$0xff]
        %v257 = vld [vmem:[%s223 + $0x40] sm:$0xff]
        %v258 = vld [vmem:[%s223 + $0x48] sm:$0xff]
        %v259 = vld [vmem:[%s223 + $0x50] sm:$0xff]
        %v260 = vld [vmem:[%s223 + $0x58] sm:$0xff]
        %v261 = vld [vmem:[%s223 + $0x60] sm:$0xff]
        %v262 = vld [vmem:[%s223 + $0x68] sm:$0xff]
        %v263 = vld [vmem:[%s223 + $0x70] sm:$0xff]
        %v264 = vld [vmem:[%s223 + $0x78] sm:$0xff]
        %v265 = vld [vmem:[%s1] sm:$0xf]
        %v266 = vld [vmem:[%s1 + $0x4] sm:$0xf]
        %v267 = vld [vmem:[%s1 + $0x8] sm:$0xf]
        %v268 = vld [vmem:[%s1 + $0xc] sm:$0xf]
        %v269 = vld [vmem:[%s1 + $0x10] sm:$0xf]
        %v270 = vld [vmem:[%s1 + $0x14] sm:$0xf]
        %v271 = vld [vmem:[%s1 + $0x18] sm:$0xf]
        %v272 = vld [vmem:[%s1 + $0x1c] sm:$0xf]
        %v281 = vunpack.c.l.b16 %v265
        %v282 = vunpack.c.l.b16 %v266
        %v283 = vunpack.c.l.b16 %v267
        %v284 = vunpack.c.l.b16 %v268
        %v285 = vunpack.c.l.b16 %v269
        %v286 = vunpack.c.l.b16 %v270
        %v287 = vunpack.c.l.b16 %v271
        %v288 = vunpack.c.l.b16 %v272
        %v289 = vpack.c.b16 %v282, %v281
        %v290 = vpack.c.b16 %v284, %v283
        %v291 = vpack.c.b16 %v286, %v285
        %v292 = vpack.c.b16 %v288, %v287
        %v309 = vunpack.c.l.b16 %v249
        %v310 = vunpack.c.h.b16 %v249
        %v311 = vunpack.c.l.b16 %v250
        %v312 = vunpack.c.h.b16 %v250
        %v313 = vunpack.c.l.b16 %v251
        %v314 = vunpack.c.h.b16 %v251
        %v315 = vunpack.c.l.b16 %v252
        %v316 = vunpack.c.h.b16 %v252
        %v317 = vunpack.c.l.b16 %v253
        %v318 = vunpack.c.h.b16 %v253
        %v319 = vunpack.c.l.b16 %v254
        %v320 = vunpack.c.h.b16 %v254
        %v321 = vunpack.c.l.b16 %v255
        %v322 = vunpack.c.h.b16 %v255
        %v323 = vunpack.c.l.b16 %v256
        %v324 = vunpack.c.h.b16 %v256
        %v325 = vunpack.c.l.b16 %v257
        %v326 = vunpack.c.h.b16 %v257
        %v327 = vunpack.c.l.b16 %v258
        %v328 = vunpack.c.h.b16 %v258
        %v329 = vunpack.c.l.b16 %v259
        %v330 = vunpack.c.h.b16 %v259
        %v331 = vunpack.c.l.b16 %v260
        %v332 = vunpack.c.h.b16 %v260
        %v333 = vunpack.c.l.b16 %v261
        %v334 = vunpack.c.h.b16 %v261
        %v335 = vunpack.c.l.b16 %v262
        %v336 = vunpack.c.h.b16 %v262
        %v337 = vunpack.c.l.b16 %v263
        %v338 = vunpack.c.h.b16 %v263
        %v339 = vunpack.c.l.b16 %v264
        %v340 = vunpack.c.h.b16 %v264
        %v341 = vpack.c.b16 %v325, %v309
        %v342 = vpack.c.b16 %v326, %v310
        %v343 = vpack.c.b16 %v327, %v311
        %v344 = vpack.c.b16 %v328, %v312
        %v345 = vpack.c.b16 %v329, %v313
        %v346 = vpack.c.b16 %v330, %v314
        %v347 = vpack.c.b16 %v331, %v315
        %v348 = vpack.c.b16 %v332, %v316
        %v349 = vpack.c.b16 %v333, %v317
        %v350 = vpack.c.b16 %v334, %v318
        %v351 = vpack.c.b16 %v335, %v319
        %v352 = vpack.c.b16 %v336, %v320
        %v353 = vpack.c.b16 %v337, %v321
        %v354 = vpack.c.b16 %v338, %v322
        %v355 = vpack.c.b16 %v339, %v323
        %v356 = vpack.c.b16 %v340, %v324
        %vm373 = vcmask 130048
        %v375 = vsel %vm373, %v289, 0
        %v378 = vsel %vm373, %v290, 0
        %v381 = vsel %vm373, %v291, 0
        %v384 = vsel %vm373, %v292, 0
        %386 = vmatprep.subr.bf16.mxu0 0
        %387 = vmatpush1.bf16.msra.mxu0 0
        %388 = vmatprep.subr.bf16.mxu0 0
        %389 = vmatpush1.bf16.msra.mxu0 0
        %390 = vmatprep.subr.bf16.mxu0 0
        %391 = vmatpush1.bf16.msra.mxu0 0
        %392 = vmatprep.subr.bf16.mxu0 0
        %393 = vmatpush1.bf16.msra.mxu0 0
        %394 = vmatprep.subr.bf16.mxu0 0
        %395 = vmatpush1.bf16.msra.mxu0 0
        %396 = vmatprep.subr.bf16.mxu0 0
        %397 = vmatpush1.bf16.msra.mxu0 0
        %398 = vmatprep.subr.bf16.mxu0 0
        %399 = vmatpush1.bf16.msra.mxu0 0
        %400 = vmatprep.subr.bf16.mxu0 %v342
        %401 = vmatpush1.bf16.msra.mxu0 %v341
        %402 = vmatprep.subr.bf16.mxu0 0
        %403 = vmatpush2.bf16.msra.mxu0 0
        %404 = vmatprep.subr.bf16.mxu0 0
        %405 = vmatpush2.bf16.msra.mxu0 0
        %406 = vmatprep.subr.bf16.mxu0 0
        %407 = vmatpush2.bf16.msra.mxu0 0
        %408 = vmatprep.subr.bf16.mxu0 0
        %409 = vmatpush2.bf16.msra.mxu0 0
        %410 = vmatprep.subr.bf16.mxu0 0
        %411 = vmatpush2.bf16.msra.mxu0 0
        %412 = vmatprep.subr.bf16.mxu0 0
        %413 = vmatpush2.bf16.msra.mxu0 0
        %414 = vmatprep.subr.bf16.mxu0 0
        %415 = vmatpush2.bf16.msra.mxu0 0
        %416 = vmatprep.subr.bf16.mxu0 0
        %417 = vmatpush2.bf16.msra.mxu0 0
        %418 = vmatprep.mubr.bf16.mxu0 0
        %419 = vmatmul.mubr.bf16.gmra.mxu0 %v375
        %v420 = vpop.f32.mrf.mxu0
        %v421 = vadd.f32 0.0, %v420
        %v422 = vpop.f32.mrf.mxu0
        %v423 = vadd.f32 0.0, %v422
        %v424 = vpop.f32.mrf.mxu0
        %v425 = vadd.f32 0.0, %v424
        %v426 = vpop.f32.mrf.mxu0
        %v427 = vadd.f32 0.0, %v426
        %428 = vmatprep.mubr.bf16.mxu0 0
        %429 = vmatmul.mubr.bf16.gmra.mxu0 %v378
        %v430 = vpop.f32.mrf.mxu0
        %v431 = vadd.f32 0.0, %v430
        %v432 = vpop.f32.mrf.mxu0
        %v433 = vadd.f32 0.0, %v432
        %v434 = vpop.f32.mrf.mxu0
        %v435 = vadd.f32 0.0, %v434
        %v436 = vpop.f32.mrf.mxu0
        %v437 = vadd.f32 0.0, %v436
        %438 = vmatprep.mubr.bf16.mxu0 0
        %439 = vmatmul.mubr.bf16.gmra.mxu0 %v381
        %v440 = vpop.f32.mrf.mxu0
        %v441 = vadd.f32 0.0, %v440
        %v442 = vpop.f32.mrf.mxu0
        %v443 = vadd.f32 0.0, %v442
        %v444 = vpop.f32.mrf.mxu0
        %v445 = vadd.f32 0.0, %v444
        %v446 = vpop.f32.mrf.mxu0
        %v447 = vadd.f32 0.0, %v446
        %448 = vmatprep.mubr.bf16.mxu0 0
        %449 = vmatmul.mubr.bf16.gmra.mxu0 %v384
        %v450 = vpop.f32.mrf.mxu0
        %v451 = vadd.f32 0.0, %v450
        %v452 = vpop.f32.mrf.mxu0
        %v453 = vadd.f32 0.0, %v452
        %v454 = vpop.f32.mrf.mxu0
        %v455 = vadd.f32 0.0, %v454
        %v456 = vpop.f32.mrf.mxu0
        %v457 = vadd.f32 0.0, %v456
        %458 = vdwg.mxu0
        %459 = vmatprep.subr.bf16.mxu0 0
        %460 = vmatpush1.bf16.msra.mxu0 0
        %461 = vmatprep.subr.bf16.mxu0 0
        %462 = vmatpush1.bf16.msra.mxu0 0
        %463 = vmatprep.subr.bf16.mxu0 0
        %464 = vmatpush1.bf16.msra.mxu0 0
        %465 = vmatprep.subr.bf16.mxu0 0
        %466 = vmatpush1.bf16.msra.mxu0 0
        %467 = vmatprep.subr.bf16.mxu0 0
        %468 = vmatpush1.bf16.msra.mxu0 0
        %469 = vmatprep.subr.bf16.mxu0 0
        %470 = vmatpush1.bf16.msra.mxu0 0
        %471 = vmatprep.subr.bf16.mxu0 0
        %472 = vmatpush1.bf16.msra.mxu0 0
        %473 = vmatprep.subr.bf16.mxu0 %v344
        %474 = vmatpush1.bf16.msra.mxu0 %v343
        %475 = vmatprep.subr.bf16.mxu0 0
        %476 = vmatpush2.bf16.msra.mxu0 0
        %477 = vmatprep.subr.bf16.mxu0 0
        %478 = vmatpush2.bf16.msra.mxu0 0
        %479 = vmatprep.subr.bf16.mxu0 0
        %480 = vmatpush2.bf16.msra.mxu0 0
        %481 = vmatprep.subr.bf16.mxu0 0
        %482 = vmatpush2.bf16.msra.mxu0 0
        %483 = vmatprep.subr.bf16.mxu0 0
        %484 = vmatpush2.bf16.msra.mxu0 0
        %485 = vmatprep.subr.bf16.mxu0 0
        %486 = vmatpush2.bf16.msra.mxu0 0
        %487 = vmatprep.subr.bf16.mxu0 0
        %488 = vmatpush2.bf16.msra.mxu0 0
        %489 = vmatprep.subr.bf16.mxu0 0
        %490 = vmatpush2.bf16.msra.mxu0 0
        %491 = vmatprep.mubr.bf16.mxu0 0
        %492 = vmatmul.mubr.bf16.gmra.mxu0 %v375
        %v493 = vpop.f32.mrf.mxu0
        %v494 = vadd.f32 0.0, %v493
        %v495 = vpop.f32.mrf.mxu0
        %v496 = vadd.f32 0.0, %v495
        %v497 = vpop.f32.mrf.mxu0
        %v498 = vadd.f32 0.0, %v497
        %v499 = vpop.f32.mrf.mxu0
        %v500 = vadd.f32 0.0, %v499
        %501 = vmatprep.mubr.bf16.mxu0 0
        %502 = vmatmul.mubr.bf16.gmra.mxu0 %v378
        %v503 = vpop.f32.mrf.mxu0
        %v504 = vadd.f32 0.0, %v503
        %v505 = vpop.f32.mrf.mxu0
        %v506 = vadd.f32 0.0, %v505
        %v507 = vpop.f32.mrf.mxu0
        %v508 = vadd.f32 0.0, %v507
        %v509 = vpop.f32.mrf.mxu0
        %v510 = vadd.f32 0.0, %v509
        %511 = vmatprep.mubr.bf16.mxu0 0
        %512 = vmatmul.mubr.bf16.gmra.mxu0 %v381
        %v513 = vpop.f32.mrf.mxu0
        %v514 = vadd.f32 0.0, %v513
        %v515 = vpop.f32.mrf.mxu0
        %v516 = vadd.f32 0.0, %v515
        %v517 = vpop.f32.mrf.mxu0
        %v518 = vadd.f32 0.0, %v517
        %v519 = vpop.f32.mrf.mxu0
        %v520 = vadd.f32 0.0, %v519
        %521 = vmatprep.mubr.bf16.mxu0 0
        %522 = vmatmul.mubr.bf16.gmra.mxu0 %v384
        %v523 = vpop.f32.mrf.mxu0
        %v524 = vadd.f32 0.0, %v523
        %v525 = vpop.f32.mrf.mxu0
        %v526 = vadd.f32 0.0, %v525
        %v527 = vpop.f32.mrf.mxu0
        %v528 = vadd.f32 0.0, %v527
        %v529 = vpop.f32.mrf.mxu0
        %v530 = vadd.f32 0.0, %v529
        %531 = vdwg.mxu0
        %532 = vmatprep.subr.bf16.mxu0 0
        %533 = vmatpush1.bf16.msra.mxu0 0
        %534 = vmatprep.subr.bf16.mxu0 0
        %535 = vmatpush1.bf16.msra.mxu0 0
        %536 = vmatprep.subr.bf16.mxu0 0
        %537 = vmatpush1.bf16.msra.mxu0 0
        %538 = vmatprep.subr.bf16.mxu0 0
        %539 = vmatpush1.bf16.msra.mxu0 0
        %540 = vmatprep.subr.bf16.mxu0 0
        %541 = vmatpush1.bf16.msra.mxu0 0
        %542 = vmatprep.subr.bf16.mxu0 0
        %543 = vmatpush1.bf16.msra.mxu0 0
        %544 = vmatprep.subr.bf16.mxu0 0
        %545 = vmatpush1.bf16.msra.mxu0 0
        %546 = vmatprep.subr.bf16.mxu0 %v346
        %547 = vmatpush1.bf16.msra.mxu0 %v345
        %548 = vmatprep.subr.bf16.mxu0 0
        %549 = vmatpush2.bf16.msra.mxu0 0
        %550 = vmatprep.subr.bf16.mxu0 0
        %551 = vmatpush2.bf16.msra.mxu0 0
        %552 = vmatprep.subr.bf16.mxu0 0
        %553 = vmatpush2.bf16.msra.mxu0 0
        %554 = vmatprep.subr.bf16.mxu0 0
        %555 = vmatpush2.bf16.msra.mxu0 0
        %556 = vmatprep.subr.bf16.mxu0 0
        %557 = vmatpush2.bf16.msra.mxu0 0
        %558 = vmatprep.subr.bf16.mxu0 0
        %559 = vmatpush2.bf16.msra.mxu0 0
        %560 = vmatprep.subr.bf16.mxu0 0
        %561 = vmatpush2.bf16.msra.mxu0 0
        %562 = vmatprep.subr.bf16.mxu0 0
        %563 = vmatpush2.bf16.msra.mxu0 0
        %564 = vmatprep.mubr.bf16.mxu0 0
        %565 = vmatmul.mubr.bf16.gmra.mxu0 %v375
        %v566 = vpop.f32.mrf.mxu0
        %v567 = vadd.f32 0.0, %v566
        %v568 = vpop.f32.mrf.mxu0
        %v569 = vadd.f32 0.0, %v568
        %v570 = vpop.f32.mrf.mxu0
        %v571 = vadd.f32 0.0, %v570
        %v572 = vpop.f32.mrf.mxu0
        %v573 = vadd.f32 0.0, %v572
        %574 = vmatprep.mubr.bf16.mxu0 0
        %575 = vmatmul.mubr.bf16.gmra.mxu0 %v378
        %v576 = vpop.f32.mrf.mxu0
        %v577 = vadd.f32 0.0, %v576
        %v578 = vpop.f32.mrf.mxu0
        %v579 = vadd.f32 0.0, %v578
        %v580 = vpop.f32.mrf.mxu0
        %v581 = vadd.f32 0.0, %v580
        %v582 = vpop.f32.mrf.mxu0
        %v583 = vadd.f32 0.0, %v582
        %584 = vmatprep.mubr.bf16.mxu0 0
        %585 = vmatmul.mubr.bf16.gmra.mxu0 %v381
        %v586 = vpop.f32.mrf.mxu0
        %v587 = vadd.f32 0.0, %v586
        %v588 = vpop.f32.mrf.mxu0
        %v589 = vadd.f32 0.0, %v588
        %v590 = vpop.f32.mrf.mxu0
        %v591 = vadd.f32 0.0, %v590
        %v592 = vpop.f32.mrf.mxu0
        %v593 = vadd.f32 0.0, %v592
        %594 = vmatprep.mubr.bf16.mxu0 0
        %595 = vmatmul.mubr.bf16.gmra.mxu0 %v384
        %v596 = vpop.f32.mrf.mxu0
        %v597 = vadd.f32 0.0, %v596
        %v598 = vpop.f32.mrf.mxu0
        %v599 = vadd.f32 0.0, %v598
        %v600 = vpop.f32.mrf.mxu0
        %v601 = vadd.f32 0.0, %v600
        %v602 = vpop.f32.mrf.mxu0
        %v603 = vadd.f32 0.0, %v602
        %604 = vdwg.mxu0
        %605 = vmatprep.subr.bf16.mxu0 0
        %606 = vmatpush1.bf16.msra.mxu0 0
        %607 = vmatprep.subr.bf16.mxu0 0
        %608 = vmatpush1.bf16.msra.mxu0 0
        %609 = vmatprep.subr.bf16.mxu0 0
        %610 = vmatpush1.bf16.msra.mxu0 0
        %611 = vmatprep.subr.bf16.mxu0 0
        %612 = vmatpush1.bf16.msra.mxu0 0
        %613 = vmatprep.subr.bf16.mxu0 0
        %614 = vmatpush1.bf16.msra.mxu0 0
        %615 = vmatprep.subr.bf16.mxu0 0
        %616 = vmatpush1.bf16.msra.mxu0 0
        %617 = vmatprep.subr.bf16.mxu0 0
        %618 = vmatpush1.bf16.msra.mxu0 0
        %619 = vmatprep.subr.bf16.mxu0 %v348
        %620 = vmatpush1.bf16.msra.mxu0 %v347
        %621 = vmatprep.subr.bf16.mxu0 0
        %622 = vmatpush2.bf16.msra.mxu0 0
        %623 = vmatprep.subr.bf16.mxu0 0
        %624 = vmatpush2.bf16.msra.mxu0 0
        %625 = vmatprep.subr.bf16.mxu0 0
        %626 = vmatpush2.bf16.msra.mxu0 0
        %627 = vmatprep.subr.bf16.mxu0 0
        %628 = vmatpush2.bf16.msra.mxu0 0
        %629 = vmatprep.subr.bf16.mxu0 0
        %630 = vmatpush2.bf16.msra.mxu0 0
        %631 = vmatprep.subr.bf16.mxu0 0
        %632 = vmatpush2.bf16.msra.mxu0 0
        %633 = vmatprep.subr.bf16.mxu0 0
        %634 = vmatpush2.bf16.msra.mxu0 0
        %635 = vmatprep.subr.bf16.mxu0 0
        %636 = vmatpush2.bf16.msra.mxu0 0
        %637 = vmatprep.mubr.bf16.mxu0 0
        %638 = vmatmul.mubr.bf16.gmra.mxu0 %v375
        %v639 = vpop.f32.mrf.mxu0
        %v640 = vadd.f32 0.0, %v639
        %v641 = vpop.f32.mrf.mxu0
        %v642 = vadd.f32 0.0, %v641
        %v643 = vpop.f32.mrf.mxu0
        %v644 = vadd.f32 0.0, %v643
        %v645 = vpop.f32.mrf.mxu0
        %v646 = vadd.f32 0.0, %v645
        %647 = vmatprep.mubr.bf16.mxu0 0
        %648 = vmatmul.mubr.bf16.gmra.mxu0 %v378
        %v649 = vpop.f32.mrf.mxu0
        %v650 = vadd.f32 0.0, %v649
        %v651 = vpop.f32.mrf.mxu0
        %v652 = vadd.f32 0.0, %v651
        %v653 = vpop.f32.mrf.mxu0
        %v654 = vadd.f32 0.0, %v653
        %v655 = vpop.f32.mrf.mxu0
        %v656 = vadd.f32 0.0, %v655
        %657 = vmatprep.mubr.bf16.mxu0 0
        %658 = vmatmul.mubr.bf16.gmra.mxu0 %v381
        %v659 = vpop.f32.mrf.mxu0
        %v660 = vadd.f32 0.0, %v659
        %v661 = vpop.f32.mrf.mxu0
        %v662 = vadd.f32 0.0, %v661
        %v663 = vpop.f32.mrf.mxu0
        %v664 = vadd.f32 0.0, %v663
        %v665 = vpop.f32.mrf.mxu0
        %v666 = vadd.f32 0.0, %v665
        %667 = vmatprep.mubr.bf16.mxu0 0
        %668 = vmatmul.mubr.bf16.gmra.mxu0 %v384
        %v669 = vpop.f32.mrf.mxu0
        %v670 = vadd.f32 0.0, %v669
        %v671 = vpop.f32.mrf.mxu0
        %v672 = vadd.f32 0.0, %v671
        %v673 = vpop.f32.mrf.mxu0
        %v674 = vadd.f32 0.0, %v673
        %v675 = vpop.f32.mrf.mxu0
        %v676 = vadd.f32 0.0, %v675
        %677 = vdwg.mxu0
        %678 = vmatprep.subr.bf16.mxu0 0
        %679 = vmatpush1.bf16.msra.mxu0 0
        %680 = vmatprep.subr.bf16.mxu0 0
        %681 = vmatpush1.bf16.msra.mxu0 0
        %682 = vmatprep.subr.bf16.mxu0 0
        %683 = vmatpush1.bf16.msra.mxu0 0
        %684 = vmatprep.subr.bf16.mxu0 0
        %685 = vmatpush1.bf16.msra.mxu0 0
        %686 = vmatprep.subr.bf16.mxu0 0
        %687 = vmatpush1.bf16.msra.mxu0 0
        %688 = vmatprep.subr.bf16.mxu0 0
        %689 = vmatpush1.bf16.msra.mxu0 0
        %690 = vmatprep.subr.bf16.mxu0 0
        %691 = vmatpush1.bf16.msra.mxu0 0
        %692 = vmatprep.subr.bf16.mxu0 %v350
        %693 = vmatpush1.bf16.msra.mxu0 %v349
        %694 = vmatprep.subr.bf16.mxu0 0
        %695 = vmatpush2.bf16.msra.mxu0 0
        %696 = vmatprep.subr.bf16.mxu0 0
        %697 = vmatpush2.bf16.msra.mxu0 0
        %698 = vmatprep.subr.bf16.mxu0 0
        %699 = vmatpush2.bf16.msra.mxu0 0
        %700 = vmatprep.subr.bf16.mxu0 0
        %701 = vmatpush2.bf16.msra.mxu0 0
        %702 = vmatprep.subr.bf16.mxu0 0
        %703 = vmatpush2.bf16.msra.mxu0 0
        %704 = vmatprep.subr.bf16.mxu0 0
        %705 = vmatpush2.bf16.msra.mxu0 0
        %706 = vmatprep.subr.bf16.mxu0 0
        %707 = vmatpush2.bf16.msra.mxu0 0
        %708 = vmatprep.subr.bf16.mxu0 0
        %709 = vmatpush2.bf16.msra.mxu0 0
        %710 = vmatprep.mubr.bf16.mxu0 0
        %711 = vmatmul.mubr.bf16.gmra.mxu0 %v375
        %v712 = vpop.f32.mrf.mxu0
        %v713 = vadd.f32 0.0, %v712
        %v714 = vpop.f32.mrf.mxu0
        %v715 = vadd.f32 0.0, %v714
        %v716 = vpop.f32.mrf.mxu0
        %v717 = vadd.f32 0.0, %v716
        %v718 = vpop.f32.mrf.mxu0
        %v719 = vadd.f32 0.0, %v718
        %720 = vmatprep.mubr.bf16.mxu0 0
        %721 = vmatmul.mubr.bf16.gmra.mxu0 %v378
        %v722 = vpop.f32.mrf.mxu0
        %v723 = vadd.f32 0.0, %v722
        %v724 = vpop.f32.mrf.mxu0
        %v725 = vadd.f32 0.0, %v724
        %v726 = vpop.f32.mrf.mxu0
        %v727 = vadd.f32 0.0, %v726
        %v728 = vpop.f32.mrf.mxu0
        %v729 = vadd.f32 0.0, %v728
        %730 = vmatprep.mubr.bf16.mxu0 0
        %731 = vmatmul.mubr.bf16.gmra.mxu0 %v381
        %v732 = vpop.f32.mrf.mxu0
        %v733 = vadd.f32 0.0, %v732
        %v734 = vpop.f32.mrf.mxu0
        %v735 = vadd.f32 0.0, %v734
        %v736 = vpop.f32.mrf.mxu0
        %v737 = vadd.f32 0.0, %v736
        %v738 = vpop.f32.mrf.mxu0
        %v739 = vadd.f32 0.0, %v738
        %740 = vmatprep.mubr.bf16.mxu0 0
        %741 = vmatmul.mubr.bf16.gmra.mxu0 %v384
        %v742 = vpop.f32.mrf.mxu0
        %v743 = vadd.f32 0.0, %v742
        %v744 = vpop.f32.mrf.mxu0
        %v745 = vadd.f32 0.0, %v744
        %v746 = vpop.f32.mrf.mxu0
        %v747 = vadd.f32 0.0, %v746
        %v748 = vpop.f32.mrf.mxu0
        %v749 = vadd.f32 0.0, %v748
        %750 = vdwg.mxu0
        %751 = vmatprep.subr.bf16.mxu0 0
        %752 = vmatpush1.bf16.msra.mxu0 0
        %753 = vmatprep.subr.bf16.mxu0 0
        %754 = vmatpush1.bf16.msra.mxu0 0
        %755 = vmatprep.subr.bf16.mxu0 0
        %756 = vmatpush1.bf16.msra.mxu0 0
        %757 = vmatprep.subr.bf16.mxu0 0
        %758 = vmatpush1.bf16.msra.mxu0 0
        %759 = vmatprep.subr.bf16.mxu0 0
        %760 = vmatpush1.bf16.msra.mxu0 0
        %761 = vmatprep.subr.bf16.mxu0 0
        %762 = vmatpush1.bf16.msra.mxu0 0
        %763 = vmatprep.subr.bf16.mxu0 0
        %764 = vmatpush1.bf16.msra.mxu0 0
        %765 = vmatprep.subr.bf16.mxu0 %v352
        %766 = vmatpush1.bf16.msra.mxu0 %v351
        %767 = vmatprep.subr.bf16.mxu0 0
        %768 = vmatpush2.bf16.msra.mxu0 0
        %769 = vmatprep.subr.bf16.mxu0 0
        %770 = vmatpush2.bf16.msra.mxu0 0
        %771 = vmatprep.subr.bf16.mxu0 0
        %772 = vmatpush2.bf16.msra.mxu0 0
        %773 = vmatprep.subr.bf16.mxu0 0
        %774 = vmatpush2.bf16.msra.mxu0 0
        %775 = vmatprep.subr.bf16.mxu0 0
        %776 = vmatpush2.bf16.msra.mxu0 0
        %777 = vmatprep.subr.bf16.mxu0 0
        %778 = vmatpush2.bf16.msra.mxu0 0
        %779 = vmatprep.subr.bf16.mxu0 0
        %780 = vmatpush2.bf16.msra.mxu0 0
        %781 = vmatprep.subr.bf16.mxu0 0
        %782 = vmatpush2.bf16.msra.mxu0 0
        %783 = vmatprep.mubr.bf16.mxu0 0
        %784 = vmatmul.mubr.bf16.gmra.mxu0 %v375
        %v785 = vpop.f32.mrf.mxu0
        %v786 = vadd.f32 0.0, %v785
        %v787 = vpop.f32.mrf.mxu0
        %v788 = vadd.f32 0.0, %v787
        %v789 = vpop.f32.mrf.mxu0
        %v790 = vadd.f32 0.0, %v789
        %v791 = vpop.f32.mrf.mxu0
        %v792 = vadd.f32 0.0, %v791
        %793 = vmatprep.mubr.bf16.mxu0 0
        %794 = vmatmul.mubr.bf16.gmra.mxu0 %v378
        %v795 = vpop.f32.mrf.mxu0
        %v796 = vadd.f32 0.0, %v795
        %v797 = vpop.f32.mrf.mxu0
        %v798 = vadd.f32 0.0, %v797
        %v799 = vpop.f32.mrf.mxu0
        %v800 = vadd.f32 0.0, %v799
        %v801 = vpop.f32.mrf.mxu0
        %v802 = vadd.f32 0.0, %v801
        %803 = vmatprep.mubr.bf16.mxu0 0
        %804 = vmatmul.mubr.bf16.gmra.mxu0 %v381
        %v805 = vpop.f32.mrf.mxu0
        %v806 = vadd.f32 0.0, %v805
        %v807 = vpop.f32.mrf.mxu0
        %v808 = vadd.f32 0.0, %v807
        %v809 = vpop.f32.mrf.mxu0
        %v810 = vadd.f32 0.0, %v809
        %v811 = vpop.f32.mrf.mxu0
        %v812 = vadd.f32 0.0, %v811
        %813 = vmatprep.mubr.bf16.mxu0 0
        %814 = vmatmul.mubr.bf16.gmra.mxu0 %v384
        %v815 = vpop.f32.mrf.mxu0
        %v816 = vadd.f32 0.0, %v815
        %v817 = vpop.f32.mrf.mxu0
        %v818 = vadd.f32 0.0, %v817
        %v819 = vpop.f32.mrf.mxu0
        %v820 = vadd.f32 0.0, %v819
        %v821 = vpop.f32.mrf.mxu0
        %v822 = vadd.f32 0.0, %v821
        %823 = vdwg.mxu0
        %824 = vmatprep.subr.bf16.mxu0 0
        %825 = vmatpush1.bf16.msra.mxu0 0
        %826 = vmatprep.subr.bf16.mxu0 0
        %827 = vmatpush1.bf16.msra.mxu0 0
        %828 = vmatprep.subr.bf16.mxu0 0
        %829 = vmatpush1.bf16.msra.mxu0 0
        %830 = vmatprep.subr.bf16.mxu0 0
        %831 = vmatpush1.bf16.msra.mxu0 0
        %832 = vmatprep.subr.bf16.mxu0 0
        %833 = vmatpush1.bf16.msra.mxu0 0
        %834 = vmatprep.subr.bf16.mxu0 0
        %835 = vmatpush1.bf16.msra.mxu0 0
        %836 = vmatprep.subr.bf16.mxu0 0
        %837 = vmatpush1.bf16.msra.mxu0 0
        %838 = vmatprep.subr.bf16.mxu0 %v354
        %839 = vmatpush1.bf16.msra.mxu0 %v353
        %840 = vmatprep.subr.bf16.mxu0 0
        %841 = vmatpush2.bf16.msra.mxu0 0
        %842 = vmatprep.subr.bf16.mxu0 0
        %843 = vmatpush2.bf16.msra.mxu0 0
        %844 = vmatprep.subr.bf16.mxu0 0
        %845 = vmatpush2.bf16.msra.mxu0 0
        %846 = vmatprep.subr.bf16.mxu0 0
        %847 = vmatpush2.bf16.msra.mxu0 0
        %848 = vmatprep.subr.bf16.mxu0 0
        %849 = vmatpush2.bf16.msra.mxu0 0
        %850 = vmatprep.subr.bf16.mxu0 0
        %851 = vmatpush2.bf16.msra.mxu0 0
        %852 = vmatprep.subr.bf16.mxu0 0
        %853 = vmatpush2.bf16.msra.mxu0 0
        %854 = vmatprep.subr.bf16.mxu0 0
        %855 = vmatpush2.bf16.msra.mxu0 0
        %856 = vmatprep.mubr.bf16.mxu0 0
        %857 = vmatmul.mubr.bf16.gmra.mxu0 %v375
        %v858 = vpop.f32.mrf.mxu0
        %v859 = vadd.f32 0.0, %v858
        %v860 = vpop.f32.mrf.mxu0
        %v861 = vadd.f32 0.0, %v860
        %v862 = vpop.f32.mrf.mxu0
        %v863 = vadd.f32 0.0, %v862
        %v864 = vpop.f32.mrf.mxu0
        %v865 = vadd.f32 0.0, %v864
        %866 = vmatprep.mubr.bf16.mxu0 0
        %867 = vmatmul.mubr.bf16.gmra.mxu0 %v378
        %v868 = vpop.f32.mrf.mxu0
        %v869 = vadd.f32 0.0, %v868
        %v870 = vpop.f32.mrf.mxu0
        %v871 = vadd.f32 0.0, %v870
        %v872 = vpop.f32.mrf.mxu0
        %v873 = vadd.f32 0.0, %v872
        %v874 = vpop.f32.mrf.mxu0
        %v875 = vadd.f32 0.0, %v874
        %876 = vmatprep.mubr.bf16.mxu0 0
        %877 = vmatmul.mubr.bf16.gmra.mxu0 %v381
        %v878 = vpop.f32.mrf.mxu0
        %v879 = vadd.f32 0.0, %v878
        %v880 = vpop.f32.mrf.mxu0
        %v881 = vadd.f32 0.0, %v880
        %v882 = vpop.f32.mrf.mxu0
        %v883 = vadd.f32 0.0, %v882
        %v884 = vpop.f32.mrf.mxu0
        %v885 = vadd.f32 0.0, %v884
        %886 = vmatprep.mubr.bf16.mxu0 0
        %887 = vmatmul.mubr.bf16.gmra.mxu0 %v384
        %v888 = vpop.f32.mrf.mxu0
        %v889 = vadd.f32 0.0, %v888
        %v890 = vpop.f32.mrf.mxu0
        %v891 = vadd.f32 0.0, %v890
        %v892 = vpop.f32.mrf.mxu0
        %v893 = vadd.f32 0.0, %v892
        %v894 = vpop.f32.mrf.mxu0
        %v895 = vadd.f32 0.0, %v894
        %896 = vdwg.mxu0
        %897 = vmatprep.subr.bf16.mxu0 0
        %898 = vmatpush1.bf16.msra.mxu0 0
        %899 = vmatprep.subr.bf16.mxu0 0
        %900 = vmatpush1.bf16.msra.mxu0 0
        %901 = vmatprep.subr.bf16.mxu0 0
        %902 = vmatpush1.bf16.msra.mxu0 0
        %903 = vmatprep.subr.bf16.mxu0 0
        %904 = vmatpush1.bf16.msra.mxu0 0
        %905 = vmatprep.subr.bf16.mxu0 0
        %906 = vmatpush1.bf16.msra.mxu0 0
        %907 = vmatprep.subr.bf16.mxu0 0
        %908 = vmatpush1.bf16.msra.mxu0 0
        %909 = vmatprep.subr.bf16.mxu0 0
        %910 = vmatpush1.bf16.msra.mxu0 0
        %911 = vmatprep.subr.bf16.mxu0 %v356
        %912 = vmatpush1.bf16.msra.mxu0 %v355
        %913 = vmatprep.subr.bf16.mxu0 0
        %914 = vmatpush2.bf16.msra.mxu0 0
        %915 = vmatprep.subr.bf16.mxu0 0
        %916 = vmatpush2.bf16.msra.mxu0 0
        %917 = vmatprep.subr.bf16.mxu0 0
        %918 = vmatpush2.bf16.msra.mxu0 0
        %919 = vmatprep.subr.bf16.mxu0 0
        %920 = vmatpush2.bf16.msra.mxu0 0
        %921 = vmatprep.subr.bf16.mxu0 0
        %922 = vmatpush2.bf16.msra.mxu0 0
        %923 = vmatprep.subr.bf16.mxu0 0
        %924 = vmatpush2.bf16.msra.mxu0 0
        %925 = vmatprep.subr.bf16.mxu0 0
        %926 = vmatpush2.bf16.msra.mxu0 0
        %927 = vmatprep.subr.bf16.mxu0 0
        %928 = vmatpush2.bf16.msra.mxu0 0
        %929 = vmatprep.mubr.bf16.mxu0 0
        %930 = vmatmul.mubr.bf16.gmra.mxu0 %v375
        %v931 = vpop.f32.mrf.mxu0
        %v932 = vadd.f32 0.0, %v931
        %v933 = vpop.f32.mrf.mxu0
        %v934 = vadd.f32 0.0, %v933
        %v935 = vpop.f32.mrf.mxu0
        %v936 = vadd.f32 0.0, %v935
        %v937 = vpop.f32.mrf.mxu0
        %v938 = vadd.f32 0.0, %v937
        %939 = vmatprep.mubr.bf16.mxu0 0
        %940 = vmatmul.mubr.bf16.gmra.mxu0 %v378
        %v941 = vpop.f32.mrf.mxu0
        %v942 = vadd.f32 0.0, %v941
        %v943 = vpop.f32.mrf.mxu0
        %v944 = vadd.f32 0.0, %v943
        %v945 = vpop.f32.mrf.mxu0
        %v946 = vadd.f32 0.0, %v945
        %v947 = vpop.f32.mrf.mxu0
        %v948 = vadd.f32 0.0, %v947
        %949 = vmatprep.mubr.bf16.mxu0 0
        %950 = vmatmul.mubr.bf16.gmra.mxu0 %v381
        %v951 = vpop.f32.mrf.mxu0
        %v952 = vadd.f32 0.0, %v951
        %v953 = vpop.f32.mrf.mxu0
        %v954 = vadd.f32 0.0, %v953
        %v955 = vpop.f32.mrf.mxu0
        %v956 = vadd.f32 0.0, %v955
        %v957 = vpop.f32.mrf.mxu0
        %v958 = vadd.f32 0.0, %v957
        %959 = vmatprep.mubr.bf16.mxu0 0
        %960 = vmatmul.mubr.bf16.gmra.mxu0 %v384
        %v961 = vpop.f32.mrf.mxu0
        %v962 = vadd.f32 0.0, %v961
        %v963 = vpop.f32.mrf.mxu0
        %v964 = vadd.f32 0.0, %v963
        %v965 = vpop.f32.mrf.mxu0
        %v966 = vadd.f32 0.0, %v965
        %v967 = vpop.f32.mrf.mxu0
        %v968 = vadd.f32 0.0, %v967
        %969 = vdwg.mxu0
        %v970 = vmax.f32 %v421, 0.0
        %v971 = vmax.f32 %v423, 0.0
        %v972 = vmax.f32 %v494, 0.0
        %v973 = vmax.f32 %v496, 0.0
        %v974 = vmax.f32 %v567, 0.0
        %v975 = vmax.f32 %v569, 0.0
        %v976 = vmax.f32 %v640, 0.0
        %v977 = vmax.f32 %v642, 0.0
        %v978 = vmax.f32 %v713, 0.0
        %v979 = vmax.f32 %v715, 0.0
        %v980 = vmax.f32 %v786, 0.0
        %v981 = vmax.f32 %v788, 0.0
        %v982 = vmax.f32 %v859, 0.0
        %v983 = vmax.f32 %v861, 0.0
        %v984 = vmax.f32 %v932, 0.0
        %v985 = vmax.f32 %v934, 0.0
        %v986 = vmax.f32 %v425, 0.0
        %v987 = vmax.f32 %v427, 0.0
        %v988 = vmax.f32 %v498, 0.0
        %v989 = vmax.f32 %v500, 0.0
        %v990 = vmax.f32 %v571, 0.0
        %v991 = vmax.f32 %v573, 0.0
        %v992 = vmax.f32 %v644, 0.0
        %v993 = vmax.f32 %v646, 0.0
        %v994 = vmax.f32 %v717, 0.0
        %v995 = vmax.f32 %v719, 0.0
        %v996 = vmax.f32 %v790, 0.0
        %v997 = vmax.f32 %v792, 0.0
        %v998 = vmax.f32 %v863, 0.0
        %v999 = vmax.f32 %v865, 0.0
        %v1000 = vmax.f32 %v936, 0.0
        %v1001 = vmax.f32 %v938, 0.0
        %v1002 = vmax.f32 %v431, 0.0
        %v1003 = vmax.f32 %v433, 0.0
        %v1004 = vmax.f32 %v504, 0.0
        %v1005 = vmax.f32 %v506, 0.0
        %v1006 = vmax.f32 %v577, 0.0
        %v1007 = vmax.f32 %v579, 0.0
        %v1008 = vmax.f32 %v650, 0.0
        %v1009 = vmax.f32 %v652, 0.0
        %v1010 = vmax.f32 %v723, 0.0
        %v1011 = vmax.f32 %v725, 0.0
        %v1012 = vmax.f32 %v796, 0.0
        %v1013 = vmax.f32 %v798, 0.0
        %v1014 = vmax.f32 %v869, 0.0
        %v1015 = vmax.f32 %v871, 0.0
        %v1016 = vmax.f32 %v942, 0.0
        %v1017 = vmax.f32 %v944, 0.0
        %v1018 = vmax.f32 %v435, 0.0
        %v1019 = vmax.f32 %v437, 0.0
        %v1020 = vmax.f32 %v508, 0.0
        %v1021 = vmax.f32 %v510, 0.0
        %v1022 = vmax.f32 %v581, 0.0
        %v1023 = vmax.f32 %v583, 0.0
        %v1024 = vmax.f32 %v654, 0.0
        %v1025 = vmax.f32 %v656, 0.0
        %v1026 = vmax.f32 %v727, 0.0
        %v1027 = vmax.f32 %v729, 0.0
        %v1028 = vmax.f32 %v800, 0.0
        %v1029 = vmax.f32 %v802, 0.0
        %v1030 = vmax.f32 %v873, 0.0
        %v1031 = vmax.f32 %v875, 0.0
        %v1032 = vmax.f32 %v946, 0.0
        %v1033 = vmax.f32 %v948, 0.0
        %v1034 = vmax.f32 %v441, 0.0
        %v1035 = vmax.f32 %v443, 0.0
        %v1036 = vmax.f32 %v514, 0.0
        %v1037 = vmax.f32 %v516, 0.0
        %v1038 = vmax.f32 %v587, 0.0
        %v1039 = vmax.f32 %v589, 0.0
        %v1040 = vmax.f32 %v660, 0.0
        %v1041 = vmax.f32 %v662, 0.0
        %v1042 = vmax.f32 %v733, 0.0
        %v1043 = vmax.f32 %v735, 0.0
        %v1044 = vmax.f32 %v806, 0.0
        %v1045 = vmax.f32 %v808, 0.0
        %v1046 = vmax.f32 %v879, 0.0
        %v1047 = vmax.f32 %v881, 0.0
        %v1048 = vmax.f32 %v952, 0.0
        %v1049 = vmax.f32 %v954, 0.0
        %v1050 = vmax.f32 %v445, 0.0
        %v1051 = vmax.f32 %v447, 0.0
        %v1052 = vmax.f32 %v518, 0.0
        %v1053 = vmax.f32 %v520, 0.0
        %v1054 = vmax.f32 %v591, 0.0
        %v1055 = vmax.f32 %v593, 0.0
        %v1056 = vmax.f32 %v664, 0.0
        %v1057 = vmax.f32 %v666, 0.0
        %v1058 = vmax.f32 %v737, 0.0
        %v1059 = vmax.f32 %v739, 0.0
        %v1060 = vmax.f32 %v810, 0.0
        %v1061 = vmax.f32 %v812, 0.0
        %v1062 = vmax.f32 %v883, 0.0
        %v1063 = vmax.f32 %v885, 0.0
        %v1064 = vmax.f32 %v956, 0.0
        %v1065 = vmax.f32 %v958, 0.0
        %v1066 = vmax.f32 %v451, 0.0
        %v1067 = vmax.f32 %v453, 0.0
        %v1068 = vmax.f32 %v524, 0.0
        %v1069 = vmax.f32 %v526, 0.0
        %v1070 = vmax.f32 %v597, 0.0
        %v1071 = vmax.f32 %v599, 0.0
        %v1072 = vmax.f32 %v670, 0.0
        %v1073 = vmax.f32 %v672, 0.0
        %v1074 = vmax.f32 %v743, 0.0
        %v1075 = vmax.f32 %v745, 0.0
        %v1076 = vmax.f32 %v816, 0.0
        %v1077 = vmax.f32 %v818, 0.0
        %v1078 = vmax.f32 %v889, 0.0
        %v1079 = vmax.f32 %v891, 0.0
        %v1080 = vmax.f32 %v962, 0.0
        %v1081 = vmax.f32 %v964, 0.0
        %v1082 = vmax.f32 %v455, 0.0
        %v1083 = vmax.f32 %v457, 0.0
        %v1084 = vmax.f32 %v528, 0.0
        %v1085 = vmax.f32 %v530, 0.0
        %v1086 = vmax.f32 %v601, 0.0
        %v1087 = vmax.f32 %v603, 0.0
        %v1088 = vmax.f32 %v674, 0.0
        %v1089 = vmax.f32 %v676, 0.0
        %v1090 = vmax.f32 %v747, 0.0
        %v1091 = vmax.f32 %v749, 0.0
        %v1092 = vmax.f32 %v820, 0.0
        %v1093 = vmax.f32 %v822, 0.0
        %v1094 = vmax.f32 %v893, 0.0
        %v1095 = vmax.f32 %v895, 0.0
        %v1096 = vmax.f32 %v966, 0.0
        %v1097 = vmax.f32 %v968, 0.0
        %v1098 = vpack.c.bf16 %v986, %v970
        %v1099 = vpack.c.bf16 %v987, %v971
        %v1100 = vpack.c.bf16 %v988, %v972
        %v1101 = vpack.c.bf16 %v989, %v973
        %v1102 = vpack.c.bf16 %v990, %v974
        %v1103 = vpack.c.bf16 %v991, %v975
        %v1104 = vpack.c.bf16 %v992, %v976
        %v1105 = vpack.c.bf16 %v993, %v977
        %v1106 = vpack.c.bf16 %v994, %v978
        %v1107 = vpack.c.bf16 %v995, %v979
        %v1108 = vpack.c.bf16 %v996, %v980
        %v1109 = vpack.c.bf16 %v997, %v981
        %v1110 = vpack.c.bf16 %v998, %v982
        %v1111 = vpack.c.bf16 %v999, %v983
        %v1112 = vpack.c.bf16 %v1000, %v984
        %v1113 = vpack.c.bf16 %v1001, %v985
        %v1114 = vpack.c.bf16 %v1018, %v1002
        %v1115 = vpack.c.bf16 %v1019, %v1003
        %v1116 = vpack.c.bf16 %v1020, %v1004
        %v1117 = vpack.c.bf16 %v1021, %v1005
        %v1118 = vpack.c.bf16 %v1022, %v1006
        %v1119 = vpack.c.bf16 %v1023, %v1007
        %v1120 = vpack.c.bf16 %v1024, %v1008
        %v1121 = vpack.c.bf16 %v1025, %v1009
        %v1122 = vpack.c.bf16 %v1026, %v1010
        %v1123 = vpack.c.bf16 %v1027, %v1011
        %v1124 = vpack.c.bf16 %v1028, %v1012
        %v1125 = vpack.c.bf16 %v1029, %v1013
        %v1126 = vpack.c.bf16 %v1030, %v1014
        %v1127 = vpack.c.bf16 %v1031, %v1015
        %v1128 = vpack.c.bf16 %v1032, %v1016
        %v1129 = vpack.c.bf16 %v1033, %v1017
        %v1130 = vpack.c.bf16 %v1050, %v1034
        %v1131 = vpack.c.bf16 %v1051, %v1035
        %v1132 = vpack.c.bf16 %v1052, %v1036
        %v1133 = vpack.c.bf16 %v1053, %v1037
        %v1134 = vpack.c.bf16 %v1054, %v1038
        %v1135 = vpack.c.bf16 %v1055, %v1039
        %v1136 = vpack.c.bf16 %v1056, %v1040
        %v1137 = vpack.c.bf16 %v1057, %v1041
        %v1138 = vpack.c.bf16 %v1058, %v1042
        %v1139 = vpack.c.bf16 %v1059, %v1043
        %v1140 = vpack.c.bf16 %v1060, %v1044
        %v1141 = vpack.c.bf16 %v1061, %v1045
        %v1142 = vpack.c.bf16 %v1062, %v1046
        %v1143 = vpack.c.bf16 %v1063, %v1047
        %v1144 = vpack.c.bf16 %v1064, %v1048
        %v1145 = vpack.c.bf16 %v1065, %v1049
        %v1146 = vpack.c.bf16 %v1082, %v1066
        %v1147 = vpack.c.bf16 %v1083, %v1067
        %v1148 = vpack.c.bf16 %v1084, %v1068
        %v1149 = vpack.c.bf16 %v1085, %v1069
        %v1150 = vpack.c.bf16 %v1086, %v1070
        %v1151 = vpack.c.bf16 %v1087, %v1071
        %v1152 = vpack.c.bf16 %v1088, %v1072
        %v1153 = vpack.c.bf16 %v1089, %v1073
        %v1154 = vpack.c.bf16 %v1090, %v1074
        %v1155 = vpack.c.bf16 %v1091, %v1075
        %v1156 = vpack.c.bf16 %v1092, %v1076
        %v1157 = vpack.c.bf16 %v1093, %v1077
        %v1158 = vpack.c.bf16 %v1094, %v1078
        %v1159 = vpack.c.bf16 %v1095, %v1079
        %v1160 = vpack.c.bf16 %v1096, %v1080
        %v1161 = vpack.c.bf16 %v1097, %v1081
        %v1162 = vld [vmem:[%s2] sm:$0xf]
        %v1163 = vld [vmem:[%s2 + $0x4] sm:$0xf]
        %v1164 = vld [vmem:[%s2 + $0x8] sm:$0xf]
        %v1165 = vld [vmem:[%s2 + $0xc] sm:$0xf]
        %v1166 = vld [vmem:[%s2 + $0x10] sm:$0xf]
        %v1167 = vld [vmem:[%s2 + $0x14] sm:$0xf]
        %v1168 = vld [vmem:[%s2 + $0x18] sm:$0xf]
        %v1169 = vld [vmem:[%s2 + $0x1c] sm:$0xf]
        %v1178 = vunpack.c.l.b16 %v1162
        %v1179 = vunpack.c.l.b16 %v1163
        %v1180 = vunpack.c.l.b16 %v1164
        %v1181 = vunpack.c.l.b16 %v1165
        %v1182 = vunpack.c.l.b16 %v1166
        %v1183 = vunpack.c.l.b16 %v1167
        %v1184 = vunpack.c.l.b16 %v1168
        %v1185 = vunpack.c.l.b16 %v1169
        %v1186 = vpack.c.b16 %v1179, %v1178
        %v1187 = vpack.c.b16 %v1181, %v1180
        %v1188 = vpack.c.b16 %v1183, %v1182
        %v1189 = vpack.c.b16 %v1185, %v1184
        %vm1190 = vcmask 523264
        %v1192 = vsel %vm1190, %v1186, 0
        %v1195 = vsel %vm1190, %v1187, 0
        %v1198 = vsel %vm1190, %v1188, 0
        %v1201 = vsel %vm1190, %v1189, 0
        %1203 = vmatprep.subr.bf16.mxu0 0
        %1204 = vmatpush1.bf16.msra.mxu0 0
        %1205 = vmatprep.subr.bf16.mxu0 0
        %1206 = vmatpush1.bf16.msra.mxu0 0
        %1207 = vmatprep.subr.bf16.mxu0 0
        %1208 = vmatpush1.bf16.msra.mxu0 0
        %1209 = vmatprep.subr.bf16.mxu0 0
        %1210 = vmatpush1.bf16.msra.mxu0 0
        %1211 = vmatprep.subr.bf16.mxu0 %v1147
        %1212 = vmatpush1.bf16.msra.mxu0 %v1146
        %1213 = vmatprep.subr.bf16.mxu0 %v1131
        %1214 = vmatpush1.bf16.msra.mxu0 %v1130
        %1215 = vmatprep.subr.bf16.mxu0 %v1115
        %1216 = vmatpush1.bf16.msra.mxu0 %v1114
        %1217 = vmatprep.subr.bf16.mxu0 %v1099
        %1218 = vmatpush1.bf16.msra.mxu0 %v1098
        %1219 = vmatprep.subr.bf16.mxu0 0
        %1220 = vmatpush2.bf16.msra.mxu0 0
        %1221 = vmatprep.subr.bf16.mxu0 0
        %1222 = vmatpush2.bf16.msra.mxu0 0
        %1223 = vmatprep.subr.bf16.mxu0 0
        %1224 = vmatpush2.bf16.msra.mxu0 0
        %1225 = vmatprep.subr.bf16.mxu0 0
        %1226 = vmatpush2.bf16.msra.mxu0 0
        %1227 = vmatprep.subr.bf16.mxu0 0
        %1228 = vmatpush2.bf16.msra.mxu0 0
        %1229 = vmatprep.subr.bf16.mxu0 0
        %1230 = vmatpush2.bf16.msra.mxu0 0
        %1231 = vmatprep.subr.bf16.mxu0 0
        %1232 = vmatpush2.bf16.msra.mxu0 0
        %1233 = vmatprep.subr.bf16.mxu0 0
        %1234 = vmatpush2.bf16.msra.mxu0 0
        %1235 = vmatprep.mubr.bf16.mxu0 0
        %1236 = vmatmul.mubr.bf16.gmra.mxu0 %v1192
        %v1237 = vpop.f32.mrf.mxu0
        %v1238 = vadd.f32 0.0, %v1237
        %v1239 = vpop.f32.mrf.mxu0
        %v1240 = vadd.f32 0.0, %v1239
        %v1241 = vpop.f32.mrf.mxu0
        %v1242 = vadd.f32 0.0, %v1241
        %v1243 = vpop.f32.mrf.mxu0
        %v1244 = vadd.f32 0.0, %v1243
        %1245 = vmatprep.mubr.bf16.mxu0 0
        %1246 = vmatmul.mubr.bf16.gmra.mxu0 %v1195
        %v1247 = vpop.f32.mrf.mxu0
        %v1248 = vadd.f32 0.0, %v1247
        %v1249 = vpop.f32.mrf.mxu0
        %v1250 = vadd.f32 0.0, %v1249
        %v1251 = vpop.f32.mrf.mxu0
        %v1252 = vadd.f32 0.0, %v1251
        %v1253 = vpop.f32.mrf.mxu0
        %v1254 = vadd.f32 0.0, %v1253
        %1255 = vmatprep.mubr.bf16.mxu0 0
        %1256 = vmatmul.mubr.bf16.gmra.mxu0 %v1198
        %v1257 = vpop.f32.mrf.mxu0
        %v1258 = vadd.f32 0.0, %v1257
        %v1259 = vpop.f32.mrf.mxu0
        %v1260 = vadd.f32 0.0, %v1259
        %v1261 = vpop.f32.mrf.mxu0
        %v1262 = vadd.f32 0.0, %v1261
        %v1263 = vpop.f32.mrf.mxu0
        %v1264 = vadd.f32 0.0, %v1263
        %1265 = vmatprep.mubr.bf16.mxu0 0
        %1266 = vmatmul.mubr.bf16.gmra.mxu0 %v1201
        %v1267 = vpop.f32.mrf.mxu0
        %v1268 = vadd.f32 0.0, %v1267
        %v1269 = vpop.f32.mrf.mxu0
        %v1270 = vadd.f32 0.0, %v1269
        %v1271 = vpop.f32.mrf.mxu0
        %v1272 = vadd.f32 0.0, %v1271
        %v1273 = vpop.f32.mrf.mxu0
        %v1274 = vadd.f32 0.0, %v1273
        %1275 = vdwg.mxu0
        %1276 = vmatprep.subr.bf16.mxu0 0
        %1277 = vmatpush1.bf16.msra.mxu0 0
        %1278 = vmatprep.subr.bf16.mxu0 0
        %1279 = vmatpush1.bf16.msra.mxu0 0
        %1280 = vmatprep.subr.bf16.mxu0 0
        %1281 = vmatpush1.bf16.msra.mxu0 0
        %1282 = vmatprep.subr.bf16.mxu0 0
        %1283 = vmatpush1.bf16.msra.mxu0 0
        %1284 = vmatprep.subr.bf16.mxu0 %v1149
        %1285 = vmatpush1.bf16.msra.mxu0 %v1148
        %1286 = vmatprep.subr.bf16.mxu0 %v1133
        %1287 = vmatpush1.bf16.msra.mxu0 %v1132
        %1288 = vmatprep.subr.bf16.mxu0 %v1117
        %1289 = vmatpush1.bf16.msra.mxu0 %v1116
        %1290 = vmatprep.subr.bf16.mxu0 %v1101
        %1291 = vmatpush1.bf16.msra.mxu0 %v1100
        %1292 = vmatprep.subr.bf16.mxu0 0
        %1293 = vmatpush2.bf16.msra.mxu0 0
        %1294 = vmatprep.subr.bf16.mxu0 0
        %1295 = vmatpush2.bf16.msra.mxu0 0
        %1296 = vmatprep.subr.bf16.mxu0 0
        %1297 = vmatpush2.bf16.msra.mxu0 0
        %1298 = vmatprep.subr.bf16.mxu0 0
        %1299 = vmatpush2.bf16.msra.mxu0 0
        %1300 = vmatprep.subr.bf16.mxu0 0
        %1301 = vmatpush2.bf16.msra.mxu0 0
        %1302 = vmatprep.subr.bf16.mxu0 0
        %1303 = vmatpush2.bf16.msra.mxu0 0
        %1304 = vmatprep.subr.bf16.mxu0 0
        %1305 = vmatpush2.bf16.msra.mxu0 0
        %1306 = vmatprep.subr.bf16.mxu0 0
        %1307 = vmatpush2.bf16.msra.mxu0 0
        %1308 = vmatprep.mubr.bf16.mxu0 0
        %1309 = vmatmul.mubr.bf16.gmra.mxu0 %v1192
        %v1310 = vpop.f32.mrf.mxu0
        %v1311 = vadd.f32 0.0, %v1310
        %v1312 = vpop.f32.mrf.mxu0
        %v1313 = vadd.f32 0.0, %v1312
        %v1314 = vpop.f32.mrf.mxu0
        %v1315 = vadd.f32 0.0, %v1314
        %v1316 = vpop.f32.mrf.mxu0
        %v1317 = vadd.f32 0.0, %v1316
        %1318 = vmatprep.mubr.bf16.mxu0 0
        %1319 = vmatmul.mubr.bf16.gmra.mxu0 %v1195
        %v1320 = vpop.f32.mrf.mxu0
        %v1321 = vadd.f32 0.0, %v1320
        %v1322 = vpop.f32.mrf.mxu0
        %v1323 = vadd.f32 0.0, %v1322
        %v1324 = vpop.f32.mrf.mxu0
        %v1325 = vadd.f32 0.0, %v1324
        %v1326 = vpop.f32.mrf.mxu0
        %v1327 = vadd.f32 0.0, %v1326
        %1328 = vmatprep.mubr.bf16.mxu0 0
        %1329 = vmatmul.mubr.bf16.gmra.mxu0 %v1198
        %v1330 = vpop.f32.mrf.mxu0
        %v1331 = vadd.f32 0.0, %v1330
        %v1332 = vpop.f32.mrf.mxu0
        %v1333 = vadd.f32 0.0, %v1332
        %v1334 = vpop.f32.mrf.mxu0
        %v1335 = vadd.f32 0.0, %v1334
        %v1336 = vpop.f32.mrf.mxu0
        %v1337 = vadd.f32 0.0, %v1336
        %1338 = vmatprep.mubr.bf16.mxu0 0
        %1339 = vmatmul.mubr.bf16.gmra.mxu0 %v1201
        %v1340 = vpop.f32.mrf.mxu0
        %v1341 = vadd.f32 0.0, %v1340
        %v1342 = vpop.f32.mrf.mxu0
        %v1343 = vadd.f32 0.0, %v1342
        %v1344 = vpop.f32.mrf.mxu0
        %v1345 = vadd.f32 0.0, %v1344
        %v1346 = vpop.f32.mrf.mxu0
        %v1347 = vadd.f32 0.0, %v1346
        %1348 = vdwg.mxu0
        %1349 = vmatprep.subr.bf16.mxu0 0
        %1350 = vmatpush1.bf16.msra.mxu0 0
        %1351 = vmatprep.subr.bf16.mxu0 0
        %1352 = vmatpush1.bf16.msra.mxu0 0
        %1353 = vmatprep.subr.bf16.mxu0 0
        %1354 = vmatpush1.bf16.msra.mxu0 0
        %1355 = vmatprep.subr.bf16.mxu0 0
        %1356 = vmatpush1.bf16.msra.mxu0 0
        %1357 = vmatprep.subr.bf16.mxu0 %v1151
        %1358 = vmatpush1.bf16.msra.mxu0 %v1150
        %1359 = vmatprep.subr.bf16.mxu0 %v1135
        %1360 = vmatpush1.bf16.msra.mxu0 %v1134
        %1361 = vmatprep.subr.bf16.mxu0 %v1119
        %1362 = vmatpush1.bf16.msra.mxu0 %v1118
        %1363 = vmatprep.subr.bf16.mxu0 %v1103
        %1364 = vmatpush1.bf16.msra.mxu0 %v1102
        %1365 = vmatprep.subr.bf16.mxu0 0
        %1366 = vmatpush2.bf16.msra.mxu0 0
        %1367 = vmatprep.subr.bf16.mxu0 0
        %1368 = vmatpush2.bf16.msra.mxu0 0
        %1369 = vmatprep.subr.bf16.mxu0 0
        %1370 = vmatpush2.bf16.msra.mxu0 0
        %1371 = vmatprep.subr.bf16.mxu0 0
        %1372 = vmatpush2.bf16.msra.mxu0 0
        %1373 = vmatprep.subr.bf16.mxu0 0
        %1374 = vmatpush2.bf16.msra.mxu0 0
        %1375 = vmatprep.subr.bf16.mxu0 0
        %1376 = vmatpush2.bf16.msra.mxu0 0
        %1377 = vmatprep.subr.bf16.mxu0 0
        %1378 = vmatpush2.bf16.msra.mxu0 0
        %1379 = vmatprep.subr.bf16.mxu0 0
        %1380 = vmatpush2.bf16.msra.mxu0 0
        %1381 = vmatprep.mubr.bf16.mxu0 0
        %1382 = vmatmul.mubr.bf16.gmra.mxu0 %v1192
        %v1383 = vpop.f32.mrf.mxu0
        %v1384 = vadd.f32 0.0, %v1383
        %v1385 = vpop.f32.mrf.mxu0
        %v1386 = vadd.f32 0.0, %v1385
        %v1387 = vpop.f32.mrf.mxu0
        %v1388 = vadd.f32 0.0, %v1387
        %v1389 = vpop.f32.mrf.mxu0
        %v1390 = vadd.f32 0.0, %v1389
        %1391 = vmatprep.mubr.bf16.mxu0 0
        %1392 = vmatmul.mubr.bf16.gmra.mxu0 %v1195
        %v1393 = vpop.f32.mrf.mxu0
        %v1394 = vadd.f32 0.0, %v1393
        %v1395 = vpop.f32.mrf.mxu0
        %v1396 = vadd.f32 0.0, %v1395
        %v1397 = vpop.f32.mrf.mxu0
        %v1398 = vadd.f32 0.0, %v1397
        %v1399 = vpop.f32.mrf.mxu0
        %v1400 = vadd.f32 0.0, %v1399
        %1401 = vmatprep.mubr.bf16.mxu0 0
        %1402 = vmatmul.mubr.bf16.gmra.mxu0 %v1198
        %v1403 = vpop.f32.mrf.mxu0
        %v1404 = vadd.f32 0.0, %v1403
        %v1405 = vpop.f32.mrf.mxu0
        %v1406 = vadd.f32 0.0, %v1405
        %v1407 = vpop.f32.mrf.mxu0
        %v1408 = vadd.f32 0.0, %v1407
        %v1409 = vpop.f32.mrf.mxu0
        %v1410 = vadd.f32 0.0, %v1409
        %1411 = vmatprep.mubr.bf16.mxu0 0
        %1412 = vmatmul.mubr.bf16.gmra.mxu0 %v1201
        %v1413 = vpop.f32.mrf.mxu0
        %v1414 = vadd.f32 0.0, %v1413
        %v1415 = vpop.f32.mrf.mxu0
        %v1416 = vadd.f32 0.0, %v1415
        %v1417 = vpop.f32.mrf.mxu0
        %v1418 = vadd.f32 0.0, %v1417
        %v1419 = vpop.f32.mrf.mxu0
        %v1420 = vadd.f32 0.0, %v1419
        %1421 = vdwg.mxu0
        %1422 = vmatprep.subr.bf16.mxu0 0
        %1423 = vmatpush1.bf16.msra.mxu0 0
        %1424 = vmatprep.subr.bf16.mxu0 0
        %1425 = vmatpush1.bf16.msra.mxu0 0
        %1426 = vmatprep.subr.bf16.mxu0 0
        %1427 = vmatpush1.bf16.msra.mxu0 0
        %1428 = vmatprep.subr.bf16.mxu0 0
        %1429 = vmatpush1.bf16.msra.mxu0 0
        %1430 = vmatprep.subr.bf16.mxu0 %v1153
        %1431 = vmatpush1.bf16.msra.mxu0 %v1152
        %1432 = vmatprep.subr.bf16.mxu0 %v1137
        %1433 = vmatpush1.bf16.msra.mxu0 %v1136
        %1434 = vmatprep.subr.bf16.mxu0 %v1121
        %1435 = vmatpush1.bf16.msra.mxu0 %v1120
        %1436 = vmatprep.subr.bf16.mxu0 %v1105
        %1437 = vmatpush1.bf16.msra.mxu0 %v1104
        %1438 = vmatprep.subr.bf16.mxu0 0
        %1439 = vmatpush2.bf16.msra.mxu0 0
        %1440 = vmatprep.subr.bf16.mxu0 0
        %1441 = vmatpush2.bf16.msra.mxu0 0
        %1442 = vmatprep.subr.bf16.mxu0 0
        %1443 = vmatpush2.bf16.msra.mxu0 0
        %1444 = vmatprep.subr.bf16.mxu0 0
        %1445 = vmatpush2.bf16.msra.mxu0 0
        %1446 = vmatprep.subr.bf16.mxu0 0
        %1447 = vmatpush2.bf16.msra.mxu0 0
        %1448 = vmatprep.subr.bf16.mxu0 0
        %1449 = vmatpush2.bf16.msra.mxu0 0
        %1450 = vmatprep.subr.bf16.mxu0 0
        %1451 = vmatpush2.bf16.msra.mxu0 0
        %1452 = vmatprep.subr.bf16.mxu0 0
        %1453 = vmatpush2.bf16.msra.mxu0 0
        %1454 = vmatprep.mubr.bf16.mxu0 0
        %1455 = vmatmul.mubr.bf16.gmra.mxu0 %v1192
        %v1456 = vpop.f32.mrf.mxu0
        %v1457 = vadd.f32 0.0, %v1456
        %v1458 = vpop.f32.mrf.mxu0
        %v1459 = vadd.f32 0.0, %v1458
        %v1460 = vpop.f32.mrf.mxu0
        %v1461 = vadd.f32 0.0, %v1460
        %v1462 = vpop.f32.mrf.mxu0
        %v1463 = vadd.f32 0.0, %v1462
        %1464 = vmatprep.mubr.bf16.mxu0 0
        %1465 = vmatmul.mubr.bf16.gmra.mxu0 %v1195
        %v1466 = vpop.f32.mrf.mxu0
        %v1467 = vadd.f32 0.0, %v1466
        %v1468 = vpop.f32.mrf.mxu0
        %v1469 = vadd.f32 0.0, %v1468
        %v1470 = vpop.f32.mrf.mxu0
        %v1471 = vadd.f32 0.0, %v1470
        %v1472 = vpop.f32.mrf.mxu0
        %v1473 = vadd.f32 0.0, %v1472
        %1474 = vmatprep.mubr.bf16.mxu0 0
        %1475 = vmatmul.mubr.bf16.gmra.mxu0 %v1198
        %v1476 = vpop.f32.mrf.mxu0
        %v1477 = vadd.f32 0.0, %v1476
        %v1478 = vpop.f32.mrf.mxu0
        %v1479 = vadd.f32 0.0, %v1478
        %v1480 = vpop.f32.mrf.mxu0
        %v1481 = vadd.f32 0.0, %v1480
        %v1482 = vpop.f32.mrf.mxu0
        %v1483 = vadd.f32 0.0, %v1482
        %1484 = vmatprep.mubr.bf16.mxu0 0
        %1485 = vmatmul.mubr.bf16.gmra.mxu0 %v1201
        %v1486 = vpop.f32.mrf.mxu0
        %v1487 = vadd.f32 0.0, %v1486
        %v1488 = vpop.f32.mrf.mxu0
        %v1489 = vadd.f32 0.0, %v1488
        %v1490 = vpop.f32.mrf.mxu0
        %v1491 = vadd.f32 0.0, %v1490
        %v1492 = vpop.f32.mrf.mxu0
        %v1493 = vadd.f32 0.0, %v1492
        %1494 = vdwg.mxu0
        %1495 = vmatprep.subr.bf16.mxu0 0
        %1496 = vmatpush1.bf16.msra.mxu0 0
        %1497 = vmatprep.subr.bf16.mxu0 0
        %1498 = vmatpush1.bf16.msra.mxu0 0
        %1499 = vmatprep.subr.bf16.mxu0 0
        %1500 = vmatpush1.bf16.msra.mxu0 0
        %1501 = vmatprep.subr.bf16.mxu0 0
        %1502 = vmatpush1.bf16.msra.mxu0 0
        %1503 = vmatprep.subr.bf16.mxu0 %v1155
        %1504 = vmatpush1.bf16.msra.mxu0 %v1154
        %1505 = vmatprep.subr.bf16.mxu0 %v1139
        %1506 = vmatpush1.bf16.msra.mxu0 %v1138
        %1507 = vmatprep.subr.bf16.mxu0 %v1123
        %1508 = vmatpush1.bf16.msra.mxu0 %v1122
        %1509 = vmatprep.subr.bf16.mxu0 %v1107
        %1510 = vmatpush1.bf16.msra.mxu0 %v1106
        %1511 = vmatprep.subr.bf16.mxu0 0
        %1512 = vmatpush2.bf16.msra.mxu0 0
        %1513 = vmatprep.subr.bf16.mxu0 0
        %1514 = vmatpush2.bf16.msra.mxu0 0
        %1515 = vmatprep.subr.bf16.mxu0 0
        %1516 = vmatpush2.bf16.msra.mxu0 0
        %1517 = vmatprep.subr.bf16.mxu0 0
        %1518 = vmatpush2.bf16.msra.mxu0 0
        %1519 = vmatprep.subr.bf16.mxu0 0
        %1520 = vmatpush2.bf16.msra.mxu0 0
        %1521 = vmatprep.subr.bf16.mxu0 0
        %1522 = vmatpush2.bf16.msra.mxu0 0
        %1523 = vmatprep.subr.bf16.mxu0 0
        %1524 = vmatpush2.bf16.msra.mxu0 0
        %1525 = vmatprep.subr.bf16.mxu0 0
        %1526 = vmatpush2.bf16.msra.mxu0 0
        %1527 = vmatprep.mubr.bf16.mxu0 0
        %1528 = vmatmul.mubr.bf16.gmra.mxu0 %v1192
        %v1529 = vpop.f32.mrf.mxu0
        %v1530 = vadd.f32 0.0, %v1529
        %v1531 = vpop.f32.mrf.mxu0
        %v1532 = vadd.f32 0.0, %v1531
        %v1533 = vpop.f32.mrf.mxu0
        %v1534 = vadd.f32 0.0, %v1533
        %v1535 = vpop.f32.mrf.mxu0
        %v1536 = vadd.f32 0.0, %v1535
        %1537 = vmatprep.mubr.bf16.mxu0 0
        %1538 = vmatmul.mubr.bf16.gmra.mxu0 %v1195
        %v1539 = vpop.f32.mrf.mxu0
        %v1540 = vadd.f32 0.0, %v1539
        %v1541 = vpop.f32.mrf.mxu0
        %v1542 = vadd.f32 0.0, %v1541
        %v1543 = vpop.f32.mrf.mxu0
        %v1544 = vadd.f32 0.0, %v1543
        %v1545 = vpop.f32.mrf.mxu0
        %v1546 = vadd.f32 0.0, %v1545
        %1547 = vmatprep.mubr.bf16.mxu0 0
        %1548 = vmatmul.mubr.bf16.gmra.mxu0 %v1198
        %v1549 = vpop.f32.mrf.mxu0
        %v1550 = vadd.f32 0.0, %v1549
        %v1551 = vpop.f32.mrf.mxu0
        %v1552 = vadd.f32 0.0, %v1551
        %v1553 = vpop.f32.mrf.mxu0
        %v1554 = vadd.f32 0.0, %v1553
        %v1555 = vpop.f32.mrf.mxu0
        %v1556 = vadd.f32 0.0, %v1555
        %1557 = vmatprep.mubr.bf16.mxu0 0
        %1558 = vmatmul.mubr.bf16.gmra.mxu0 %v1201
        %v1559 = vpop.f32.mrf.mxu0
        %v1560 = vadd.f32 0.0, %v1559
        %v1561 = vpop.f32.mrf.mxu0
        %v1562 = vadd.f32 0.0, %v1561
        %v1563 = vpop.f32.mrf.mxu0
        %v1564 = vadd.f32 0.0, %v1563
        %v1565 = vpop.f32.mrf.mxu0
        %v1566 = vadd.f32 0.0, %v1565
        %1567 = vdwg.mxu0
        %1568 = vmatprep.subr.bf16.mxu0 0
        %1569 = vmatpush1.bf16.msra.mxu0 0
        %1570 = vmatprep.subr.bf16.mxu0 0
        %1571 = vmatpush1.bf16.msra.mxu0 0
        %1572 = vmatprep.subr.bf16.mxu0 0
        %1573 = vmatpush1.bf16.msra.mxu0 0
        %1574 = vmatprep.subr.bf16.mxu0 0
        %1575 = vmatpush1.bf16.msra.mxu0 0
        %1576 = vmatprep.subr.bf16.mxu0 %v1157
        %1577 = vmatpush1.bf16.msra.mxu0 %v1156
        %1578 = vmatprep.subr.bf16.mxu0 %v1141
        %1579 = vmatpush1.bf16.msra.mxu0 %v1140
        %1580 = vmatprep.subr.bf16.mxu0 %v1125
        %1581 = vmatpush1.bf16.msra.mxu0 %v1124
        %1582 = vmatprep.subr.bf16.mxu0 %v1109
        %1583 = vmatpush1.bf16.msra.mxu0 %v1108
        %1584 = vmatprep.subr.bf16.mxu0 0
        %1585 = vmatpush2.bf16.msra.mxu0 0
        %1586 = vmatprep.subr.bf16.mxu0 0
        %1587 = vmatpush2.bf16.msra.mxu0 0
        %1588 = vmatprep.subr.bf16.mxu0 0
        %1589 = vmatpush2.bf16.msra.mxu0 0
        %1590 = vmatprep.subr.bf16.mxu0 0
        %1591 = vmatpush2.bf16.msra.mxu0 0
        %1592 = vmatprep.subr.bf16.mxu0 0
        %1593 = vmatpush2.bf16.msra.mxu0 0
        %1594 = vmatprep.subr.bf16.mxu0 0
        %1595 = vmatpush2.bf16.msra.mxu0 0
        %1596 = vmatprep.subr.bf16.mxu0 0
        %1597 = vmatpush2.bf16.msra.mxu0 0
        %1598 = vmatprep.subr.bf16.mxu0 0
        %1599 = vmatpush2.bf16.msra.mxu0 0
        %1600 = vmatprep.mubr.bf16.mxu0 0
        %1601 = vmatmul.mubr.bf16.gmra.mxu0 %v1192
        %v1602 = vpop.f32.mrf.mxu0
        %v1603 = vadd.f32 0.0, %v1602
        %v1604 = vpop.f32.mrf.mxu0
        %v1605 = vadd.f32 0.0, %v1604
        %v1606 = vpop.f32.mrf.mxu0
        %v1607 = vadd.f32 0.0, %v1606
        %v1608 = vpop.f32.mrf.mxu0
        %v1609 = vadd.f32 0.0, %v1608
        %1610 = vmatprep.mubr.bf16.mxu0 0
        %1611 = vmatmul.mubr.bf16.gmra.mxu0 %v1195
        %v1612 = vpop.f32.mrf.mxu0
        %v1613 = vadd.f32 0.0, %v1612
        %v1614 = vpop.f32.mrf.mxu0
        %v1615 = vadd.f32 0.0, %v1614
        %v1616 = vpop.f32.mrf.mxu0
        %v1617 = vadd.f32 0.0, %v1616
        %v1618 = vpop.f32.mrf.mxu0
        %v1619 = vadd.f32 0.0, %v1618
        %1620 = vmatprep.mubr.bf16.mxu0 0
        %1621 = vmatmul.mubr.bf16.gmra.mxu0 %v1198
        %v1622 = vpop.f32.mrf.mxu0
        %v1623 = vadd.f32 0.0, %v1622
        %v1624 = vpop.f32.mrf.mxu0
        %v1625 = vadd.f32 0.0, %v1624
        %v1626 = vpop.f32.mrf.mxu0
        %v1627 = vadd.f32 0.0, %v1626
        %v1628 = vpop.f32.mrf.mxu0
        %v1629 = vadd.f32 0.0, %v1628
        %1630 = vmatprep.mubr.bf16.mxu0 0
        %1631 = vmatmul.mubr.bf16.gmra.mxu0 %v1201
        %v1632 = vpop.f32.mrf.mxu0
        %v1633 = vadd.f32 0.0, %v1632
        %v1634 = vpop.f32.mrf.mxu0
        %v1635 = vadd.f32 0.0, %v1634
        %v1636 = vpop.f32.mrf.mxu0
        %v1637 = vadd.f32 0.0, %v1636
        %v1638 = vpop.f32.mrf.mxu0
        %v1639 = vadd.f32 0.0, %v1638
        %1640 = vdwg.mxu0
        %1641 = vmatprep.subr.bf16.mxu0 0
        %1642 = vmatpush1.bf16.msra.mxu0 0
        %1643 = vmatprep.subr.bf16.mxu0 0
        %1644 = vmatpush1.bf16.msra.mxu0 0
        %1645 = vmatprep.subr.bf16.mxu0 0
        %1646 = vmatpush1.bf16.msra.mxu0 0
        %1647 = vmatprep.subr.bf16.mxu0 0
        %1648 = vmatpush1.bf16.msra.mxu0 0
        %1649 = vmatprep.subr.bf16.mxu0 %v1159
        %1650 = vmatpush1.bf16.msra.mxu0 %v1158
        %1651 = vmatprep.subr.bf16.mxu0 %v1143
        %1652 = vmatpush1.bf16.msra.mxu0 %v1142
        %1653 = vmatprep.subr.bf16.mxu0 %v1127
        %1654 = vmatpush1.bf16.msra.mxu0 %v1126
        %1655 = vmatprep.subr.bf16.mxu0 %v1111
        %1656 = vmatpush1.bf16.msra.mxu0 %v1110
        %1657 = vmatprep.subr.bf16.mxu0 0
        %1658 = vmatpush2.bf16.msra.mxu0 0
        %1659 = vmatprep.subr.bf16.mxu0 0
        %1660 = vmatpush2.bf16.msra.mxu0 0
        %1661 = vmatprep.subr.bf16.mxu0 0
        %1662 = vmatpush2.bf16.msra.mxu0 0
        %1663 = vmatprep.subr.bf16.mxu0 0
        %1664 = vmatpush2.bf16.msra.mxu0 0
        %1665 = vmatprep.subr.bf16.mxu0 0
        %1666 = vmatpush2.bf16.msra.mxu0 0
        %1667 = vmatprep.subr.bf16.mxu0 0
        %1668 = vmatpush2.bf16.msra.mxu0 0
        %1669 = vmatprep.subr.bf16.mxu0 0
        %1670 = vmatpush2.bf16.msra.mxu0 0
        %1671 = vmatprep.subr.bf16.mxu0 0
        %1672 = vmatpush2.bf16.msra.mxu0 0
        %1673 = vmatprep.mubr.bf16.mxu0 0
        %1674 = vmatmul.mubr.bf16.gmra.mxu0 %v1192
        %v1675 = vpop.f32.mrf.mxu0
        %v1676 = vadd.f32 0.0, %v1675
        %v1677 = vpop.f32.mrf.mxu0
        %v1678 = vadd.f32 0.0, %v1677
        %v1679 = vpop.f32.mrf.mxu0
        %v1680 = vadd.f32 0.0, %v1679
        %v1681 = vpop.f32.mrf.mxu0
        %v1682 = vadd.f32 0.0, %v1681
        %1683 = vmatprep.mubr.bf16.mxu0 0
        %1684 = vmatmul.mubr.bf16.gmra.mxu0 %v1195
        %v1685 = vpop.f32.mrf.mxu0
        %v1686 = vadd.f32 0.0, %v1685
        %v1687 = vpop.f32.mrf.mxu0
        %v1688 = vadd.f32 0.0, %v1687
        %v1689 = vpop.f32.mrf.mxu0
        %v1690 = vadd.f32 0.0, %v1689
        %v1691 = vpop.f32.mrf.mxu0
        %v1692 = vadd.f32 0.0, %v1691
        %1693 = vmatprep.mubr.bf16.mxu0 0
        %1694 = vmatmul.mubr.bf16.gmra.mxu0 %v1198
        %v1695 = vpop.f32.mrf.mxu0
        %v1696 = vadd.f32 0.0, %v1695
        %v1697 = vpop.f32.mrf.mxu0
        %v1698 = vadd.f32 0.0, %v1697
        %v1699 = vpop.f32.mrf.mxu0
        %v1700 = vadd.f32 0.0, %v1699
        %v1701 = vpop.f32.mrf.mxu0
        %v1702 = vadd.f32 0.0, %v1701
        %1703 = vmatprep.mubr.bf16.mxu0 0
        %1704 = vmatmul.mubr.bf16.gmra.mxu0 %v1201
        %v1705 = vpop.f32.mrf.mxu0
        %v1706 = vadd.f32 0.0, %v1705
        %v1707 = vpop.f32.mrf.mxu0
        %v1708 = vadd.f32 0.0, %v1707
        %v1709 = vpop.f32.mrf.mxu0
        %v1710 = vadd.f32 0.0, %v1709
        %v1711 = vpop.f32.mrf.mxu0
        %v1712 = vadd.f32 0.0, %v1711
        %1713 = vdwg.mxu0
        %1714 = vmatprep.subr.bf16.mxu0 0
        %1715 = vmatpush1.bf16.msra.mxu0 0
        %1716 = vmatprep.subr.bf16.mxu0 0
        %1717 = vmatpush1.bf16.msra.mxu0 0
        %1718 = vmatprep.subr.bf16.mxu0 0
        %1719 = vmatpush1.bf16.msra.mxu0 0
        %1720 = vmatprep.subr.bf16.mxu0 0
        %1721 = vmatpush1.bf16.msra.mxu0 0
        %1722 = vmatprep.subr.bf16.mxu0 %v1161
        %1723 = vmatpush1.bf16.msra.mxu0 %v1160
        %1724 = vmatprep.subr.bf16.mxu0 %v1145
        %1725 = vmatpush1.bf16.msra.mxu0 %v1144
        %1726 = vmatprep.subr.bf16.mxu0 %v1129
        %1727 = vmatpush1.bf16.msra.mxu0 %v1128
        %1728 = vmatprep.subr.bf16.mxu0 %v1113
        %1729 = vmatpush1.bf16.msra.mxu0 %v1112
        %1730 = vmatprep.subr.bf16.mxu0 0
        %1731 = vmatpush2.bf16.msra.mxu0 0
        %1732 = vmatprep.subr.bf16.mxu0 0
        %1733 = vmatpush2.bf16.msra.mxu0 0
        %1734 = vmatprep.subr.bf16.mxu0 0
        %1735 = vmatpush2.bf16.msra.mxu0 0
        %1736 = vmatprep.subr.bf16.mxu0 0
        %1737 = vmatpush2.bf16.msra.mxu0 0
        %1738 = vmatprep.subr.bf16.mxu0 0
        %1739 = vmatpush2.bf16.msra.mxu0 0
        %1740 = vmatprep.subr.bf16.mxu0 0
        %1741 = vmatpush2.bf16.msra.mxu0 0
        %1742 = vmatprep.subr.bf16.mxu0 0
        %1743 = vmatpush2.bf16.msra.mxu0 0
        %1744 = vmatprep.subr.bf16.mxu0 0
        %1745 = vmatpush2.bf16.msra.mxu0 0
        %1746 = vmatprep.mubr.bf16.mxu0 0
        %1747 = vmatmul.mubr.bf16.gmra.mxu0 %v1192
        %v1748 = vpop.f32.mrf.mxu0
        %v1749 = vadd.f32 0.0, %v1748
        %v1750 = vpop.f32.mrf.mxu0
        %v1751 = vadd.f32 0.0, %v1750
        %v1752 = vpop.f32.mrf.mxu0
        %v1753 = vadd.f32 0.0, %v1752
        %v1754 = vpop.f32.mrf.mxu0
        %v1755 = vadd.f32 0.0, %v1754
        %1756 = vmatprep.mubr.bf16.mxu0 0
        %1757 = vmatmul.mubr.bf16.gmra.mxu0 %v1195
        %v1758 = vpop.f32.mrf.mxu0
        %v1759 = vadd.f32 0.0, %v1758
        %v1760 = vpop.f32.mrf.mxu0
        %v1761 = vadd.f32 0.0, %v1760
        %v1762 = vpop.f32.mrf.mxu0
        %v1763 = vadd.f32 0.0, %v1762
        %v1764 = vpop.f32.mrf.mxu0
        %v1765 = vadd.f32 0.0, %v1764
        %1766 = vmatprep.mubr.bf16.mxu0 0
        %1767 = vmatmul.mubr.bf16.gmra.mxu0 %v1198
        %v1768 = vpop.f32.mrf.mxu0
        %v1769 = vadd.f32 0.0, %v1768
        %v1770 = vpop.f32.mrf.mxu0
        %v1771 = vadd.f32 0.0, %v1770
        %v1772 = vpop.f32.mrf.mxu0
        %v1773 = vadd.f32 0.0, %v1772
        %v1774 = vpop.f32.mrf.mxu0
        %v1775 = vadd.f32 0.0, %v1774
        %1776 = vmatprep.mubr.bf16.mxu0 0
        %1777 = vmatmul.mubr.bf16.gmra.mxu0 %v1201
        %v1778 = vpop.f32.mrf.mxu0
        %v1779 = vadd.f32 0.0, %v1778
        %v1780 = vpop.f32.mrf.mxu0
        %v1781 = vadd.f32 0.0, %v1780
        %v1782 = vpop.f32.mrf.mxu0
        %v1783 = vadd.f32 0.0, %v1782
        %v1784 = vpop.f32.mrf.mxu0
        %v1785 = vadd.f32 0.0, %v1784
        %1786 = vdwg.mxu0
        %v1787 = vmax.f32 %v1238, 0.0
        %v1788 = vmax.f32 %v1240, 0.0
        %v1789 = vmax.f32 %v1311, 0.0
        %v1790 = vmax.f32 %v1313, 0.0
        %v1791 = vmax.f32 %v1384, 0.0
        %v1792 = vmax.f32 %v1386, 0.0
        %v1793 = vmax.f32 %v1457, 0.0
        %v1794 = vmax.f32 %v1459, 0.0
        %v1795 = vmax.f32 %v1530, 0.0
        %v1796 = vmax.f32 %v1532, 0.0
        %v1797 = vmax.f32 %v1603, 0.0
        %v1798 = vmax.f32 %v1605, 0.0
        %v1799 = vmax.f32 %v1676, 0.0
        %v1800 = vmax.f32 %v1678, 0.0
        %v1801 = vmax.f32 %v1749, 0.0
        %v1802 = vmax.f32 %v1751, 0.0
        %v1803 = vmax.f32 %v1242, 0.0
        %v1804 = vmax.f32 %v1244, 0.0
        %v1805 = vmax.f32 %v1315, 0.0
        %v1806 = vmax.f32 %v1317, 0.0
        %v1807 = vmax.f32 %v1388, 0.0
        %v1808 = vmax.f32 %v1390, 0.0
        %v1809 = vmax.f32 %v1461, 0.0
        %v1810 = vmax.f32 %v1463, 0.0
        %v1811 = vmax.f32 %v1534, 0.0
        %v1812 = vmax.f32 %v1536, 0.0
        %v1813 = vmax.f32 %v1607, 0.0
        %v1814 = vmax.f32 %v1609, 0.0
        %v1815 = vmax.f32 %v1680, 0.0
        %v1816 = vmax.f32 %v1682, 0.0
        %v1817 = vmax.f32 %v1753, 0.0
        %v1818 = vmax.f32 %v1755, 0.0
        %v1819 = vmax.f32 %v1248, 0.0
        %v1820 = vmax.f32 %v1250, 0.0
        %v1821 = vmax.f32 %v1321, 0.0
        %v1822 = vmax.f32 %v1323, 0.0
        %v1823 = vmax.f32 %v1394, 0.0
        %v1824 = vmax.f32 %v1396, 0.0
        %v1825 = vmax.f32 %v1467, 0.0
        %v1826 = vmax.f32 %v1469, 0.0
        %v1827 = vmax.f32 %v1540, 0.0
        %v1828 = vmax.f32 %v1542, 0.0
        %v1829 = vmax.f32 %v1613, 0.0
        %v1830 = vmax.f32 %v1615, 0.0
        %v1831 = vmax.f32 %v1686, 0.0
        %v1832 = vmax.f32 %v1688, 0.0
        %v1833 = vmax.f32 %v1759, 0.0
        %v1834 = vmax.f32 %v1761, 0.0
        %v1835 = vmax.f32 %v1252, 0.0
        %v1836 = vmax.f32 %v1254, 0.0
        %v1837 = vmax.f32 %v1325, 0.0
        %v1838 = vmax.f32 %v1327, 0.0
        %v1839 = vmax.f32 %v1398, 0.0
        %v1840 = vmax.f32 %v1400, 0.0
        %v1841 = vmax.f32 %v1471, 0.0
        %v1842 = vmax.f32 %v1473, 0.0
        %v1843 = vmax.f32 %v1544, 0.0
        %v1844 = vmax.f32 %v1546, 0.0
        %v1845 = vmax.f32 %v1617, 0.0
        %v1846 = vmax.f32 %v1619, 0.0
        %v1847 = vmax.f32 %v1690, 0.0
        %v1848 = vmax.f32 %v1692, 0.0
        %v1849 = vmax.f32 %v1763, 0.0
        %v1850 = vmax.f32 %v1765, 0.0
        %v1851 = vmax.f32 %v1258, 0.0
        %v1852 = vmax.f32 %v1260, 0.0
        %v1853 = vmax.f32 %v1331, 0.0
        %v1854 = vmax.f32 %v1333, 0.0
        %v1855 = vmax.f32 %v1404, 0.0
        %v1856 = vmax.f32 %v1406, 0.0
        %v1857 = vmax.f32 %v1477, 0.0
        %v1858 = vmax.f32 %v1479, 0.0
        %v1859 = vmax.f32 %v1550, 0.0
        %v1860 = vmax.f32 %v1552, 0.0
        %v1861 = vmax.f32 %v1623, 0.0
        %v1862 = vmax.f32 %v1625, 0.0
        %v1863 = vmax.f32 %v1696, 0.0
        %v1864 = vmax.f32 %v1698, 0.0
        %v1865 = vmax.f32 %v1769, 0.0
        %v1866 = vmax.f32 %v1771, 0.0
        %v1867 = vmax.f32 %v1262, 0.0
        %v1868 = vmax.f32 %v1264, 0.0
        %v1869 = vmax.f32 %v1335, 0.0
        %v1870 = vmax.f32 %v1337, 0.0
        %v1871 = vmax.f32 %v1408, 0.0
        %v1872 = vmax.f32 %v1410, 0.0
        %v1873 = vmax.f32 %v1481, 0.0
        %v1874 = vmax.f32 %v1483, 0.0
        %v1875 = vmax.f32 %v1554, 0.0
        %v1876 = vmax.f32 %v1556, 0.0
        %v1877 = vmax.f32 %v1627, 0.0
        %v1878 = vmax.f32 %v1629, 0.0
        %v1879 = vmax.f32 %v1700, 0.0
        %v1880 = vmax.f32 %v1702, 0.0
        %v1881 = vmax.f32 %v1773, 0.0
        %v1882 = vmax.f32 %v1775, 0.0
        %v1883 = vmax.f32 %v1268, 0.0
        %v1884 = vmax.f32 %v1270, 0.0
        %v1885 = vmax.f32 %v1341, 0.0
        %v1886 = vmax.f32 %v1343, 0.0
        %v1887 = vmax.f32 %v1414, 0.0
        %v1888 = vmax.f32 %v1416, 0.0
        %v1889 = vmax.f32 %v1487, 0.0
        %v1890 = vmax.f32 %v1489, 0.0
        %v1891 = vmax.f32 %v1560, 0.0
        %v1892 = vmax.f32 %v1562, 0.0
        %v1893 = vmax.f32 %v1633, 0.0
        %v1894 = vmax.f32 %v1635, 0.0
        %v1895 = vmax.f32 %v1706, 0.0
        %v1896 = vmax.f32 %v1708, 0.0
        %v1897 = vmax.f32 %v1779, 0.0
        %v1898 = vmax.f32 %v1781, 0.0
        %v1899 = vmax.f32 %v1272, 0.0
        %v1900 = vmax.f32 %v1274, 0.0
        %v1901 = vmax.f32 %v1345, 0.0
        %v1902 = vmax.f32 %v1347, 0.0
        %v1903 = vmax.f32 %v1418, 0.0
        %v1904 = vmax.f32 %v1420, 0.0
        %v1905 = vmax.f32 %v1491, 0.0
        %v1906 = vmax.f32 %v1493, 0.0
        %v1907 = vmax.f32 %v1564, 0.0
        %v1908 = vmax.f32 %v1566, 0.0
        %v1909 = vmax.f32 %v1637, 0.0
        %v1910 = vmax.f32 %v1639, 0.0
        %v1911 = vmax.f32 %v1710, 0.0
        %v1912 = vmax.f32 %v1712, 0.0
        %v1913 = vmax.f32 %v1783, 0.0
        %v1914 = vmax.f32 %v1785, 0.0
        %v1915 = vpack.c.bf16 %v1803, %v1787
        %v1916 = vpack.c.bf16 %v1804, %v1788
        %v1917 = vpack.c.bf16 %v1805, %v1789
        %v1918 = vpack.c.bf16 %v1806, %v1790
        %v1919 = vpack.c.bf16 %v1807, %v1791
        %v1920 = vpack.c.bf16 %v1808, %v1792
        %v1921 = vpack.c.bf16 %v1809, %v1793
        %v1922 = vpack.c.bf16 %v1810, %v1794
        %v1923 = vpack.c.bf16 %v1811, %v1795
        %v1924 = vpack.c.bf16 %v1812, %v1796
        %v1925 = vpack.c.bf16 %v1813, %v1797
        %v1926 = vpack.c.bf16 %v1814, %v1798
        %v1927 = vpack.c.bf16 %v1815, %v1799
        %v1928 = vpack.c.bf16 %v1816, %v1800
        %v1929 = vpack.c.bf16 %v1817, %v1801
        %v1930 = vpack.c.bf16 %v1818, %v1802
        %v1931 = vpack.c.bf16 %v1835, %v1819
        %v1932 = vpack.c.bf16 %v1836, %v1820
        %v1933 = vpack.c.bf16 %v1837, %v1821
        %v1934 = vpack.c.bf16 %v1838, %v1822
        %v1935 = vpack.c.bf16 %v1839, %v1823
        %v1936 = vpack.c.bf16 %v1840, %v1824
        %v1937 = vpack.c.bf16 %v1841, %v1825
        %v1938 = vpack.c.bf16 %v1842, %v1826
        %v1939 = vpack.c.bf16 %v1843, %v1827
        %v1940 = vpack.c.bf16 %v1844, %v1828
        %v1941 = vpack.c.bf16 %v1845, %v1829
        %v1942 = vpack.c.bf16 %v1846, %v1830
        %v1943 = vpack.c.bf16 %v1847, %v1831
        %v1944 = vpack.c.bf16 %v1848, %v1832
        %v1945 = vpack.c.bf16 %v1849, %v1833
        %v1946 = vpack.c.bf16 %v1850, %v1834
        %v1947 = vpack.c.bf16 %v1867, %v1851
        %v1948 = vpack.c.bf16 %v1868, %v1852
        %v1949 = vpack.c.bf16 %v1869, %v1853
        %v1950 = vpack.c.bf16 %v1870, %v1854
        %v1951 = vpack.c.bf16 %v1871, %v1855
        %v1952 = vpack.c.bf16 %v1872, %v1856
        %v1953 = vpack.c.bf16 %v1873, %v1857
        %v1954 = vpack.c.bf16 %v1874, %v1858
        %v1955 = vpack.c.bf16 %v1875, %v1859
        %v1956 = vpack.c.bf16 %v1876, %v1860
        %v1957 = vpack.c.bf16 %v1877, %v1861
        %v1958 = vpack.c.bf16 %v1878, %v1862
        %v1959 = vpack.c.bf16 %v1879, %v1863
        %v1960 = vpack.c.bf16 %v1880, %v1864
        %v1961 = vpack.c.bf16 %v1881, %v1865
        %v1962 = vpack.c.bf16 %v1882, %v1866
        %v1963 = vpack.c.bf16 %v1899, %v1883
        %v1964 = vpack.c.bf16 %v1900, %v1884
        %v1965 = vpack.c.bf16 %v1901, %v1885
        %v1966 = vpack.c.bf16 %v1902, %v1886
        %v1967 = vpack.c.bf16 %v1903, %v1887
        %v1968 = vpack.c.bf16 %v1904, %v1888
        %v1969 = vpack.c.bf16 %v1905, %v1889
        %v1970 = vpack.c.bf16 %v1906, %v1890
        %v1971 = vpack.c.bf16 %v1907, %v1891
        %v1972 = vpack.c.bf16 %v1908, %v1892
        %v1973 = vpack.c.bf16 %v1909, %v1893
        %v1974 = vpack.c.bf16 %v1910, %v1894
        %v1975 = vpack.c.bf16 %v1911, %v1895
        %v1976 = vpack.c.bf16 %v1912, %v1896
        %v1977 = vpack.c.bf16 %v1913, %v1897
        %v1978 = vpack.c.bf16 %v1914, %v1898
        %v1979 = vld [vmem:[%s3] sm:$0x1]
        %v1981 = vsel %vm1190, %v1979, 0
        %1983 = vmatprep.subr.bf16.mxu0 0
        %1984 = vmatpush1.bf16.msra.mxu0 0
        %1985 = vmatprep.subr.bf16.mxu0 0
        %1986 = vmatpush1.bf16.msra.mxu0 0
        %1987 = vmatprep.subr.bf16.mxu0 0
        %1988 = vmatpush1.bf16.msra.mxu0 0
        %1989 = vmatprep.subr.bf16.mxu0 0
        %1990 = vmatpush1.bf16.msra.mxu0 0
        %1991 = vmatprep.subr.bf16.mxu0 %v1964
        %1992 = vmatpush1.bf16.msra.mxu0 %v1963
        %1993 = vmatprep.subr.bf16.mxu0 %v1948
        %1994 = vmatpush1.bf16.msra.mxu0 %v1947
        %1995 = vmatprep.subr.bf16.mxu0 %v1932
        %1996 = vmatpush1.bf16.msra.mxu0 %v1931
        %1997 = vmatprep.subr.bf16.mxu0 %v1916
        %1998 = vmatpush1.bf16.msra.mxu0 %v1915
        %1999 = vmatprep.subr.bf16.mxu0 0
        %2000 = vmatpush2.bf16.msra.mxu0 0
        %2001 = vmatprep.subr.bf16.mxu0 0
        %2002 = vmatpush2.bf16.msra.mxu0 0
        %2003 = vmatprep.subr.bf16.mxu0 0
        %2004 = vmatpush2.bf16.msra.mxu0 0
        %2005 = vmatprep.subr.bf16.mxu0 0
        %2006 = vmatpush2.bf16.msra.mxu0 0
        %2007 = vmatprep.subr.bf16.mxu0 0
        %2008 = vmatpush2.bf16.msra.mxu0 0
        %2009 = vmatprep.subr.bf16.mxu0 0
        %2010 = vmatpush2.bf16.msra.mxu0 0
        %2011 = vmatprep.subr.bf16.mxu0 0
        %2012 = vmatpush2.bf16.msra.mxu0 0
        %2013 = vmatprep.subr.bf16.mxu0 0
        %2014 = vmatpush2.bf16.msra.mxu0 0
        %2015 = vmatprep.mubr.bf16.mxu0 0
        %2016 = vmatmul.mubr.bf16.gmra.mxu0 %v1981
        %v2017 = vpop.f32.mrf.mxu0
        %v2018 = vadd.f32 0.0, %v2017
        %v2019 = vpop.f32.mrf.mxu0
        %v2020 = vadd.f32 0.0, %v2019
        %v2021 = vpop.f32.mrf.mxu0
        %v2022 = vpop.f32.mrf.mxu0
        %2023 = vdwg.mxu0
        %2024 = vmatprep.subr.bf16.mxu0 0
        %2025 = vmatpush1.bf16.msra.mxu0 0
        %2026 = vmatprep.subr.bf16.mxu0 0
        %2027 = vmatpush1.bf16.msra.mxu0 0
        %2028 = vmatprep.subr.bf16.mxu0 0
        %2029 = vmatpush1.bf16.msra.mxu0 0
        %2030 = vmatprep.subr.bf16.mxu0 0
        %2031 = vmatpush1.bf16.msra.mxu0 0
        %2032 = vmatprep.subr.bf16.mxu0 %v1966
        %2033 = vmatpush1.bf16.msra.mxu0 %v1965
        %2034 = vmatprep.subr.bf16.mxu0 %v1950
        %2035 = vmatpush1.bf16.msra.mxu0 %v1949
        %2036 = vmatprep.subr.bf16.mxu0 %v1934
        %2037 = vmatpush1.bf16.msra.mxu0 %v1933
        %2038 = vmatprep.subr.bf16.mxu0 %v1918
        %2039 = vmatpush1.bf16.msra.mxu0 %v1917
        %2040 = vmatprep.subr.bf16.mxu0 0
        %2041 = vmatpush2.bf16.msra.mxu0 0
        %2042 = vmatprep.subr.bf16.mxu0 0
        %2043 = vmatpush2.bf16.msra.mxu0 0
        %2044 = vmatprep.subr.bf16.mxu0 0
        %2045 = vmatpush2.bf16.msra.mxu0 0
        %2046 = vmatprep.subr.bf16.mxu0 0
        %2047 = vmatpush2.bf16.msra.mxu0 0
        %2048 = vmatprep.subr.bf16.mxu0 0
        %2049 = vmatpush2.bf16.msra.mxu0 0
        %2050 = vmatprep.subr.bf16.mxu0 0
        %2051 = vmatpush2.bf16.msra.mxu0 0
        %2052 = vmatprep.subr.bf16.mxu0 0
        %2053 = vmatpush2.bf16.msra.mxu0 0
        %2054 = vmatprep.subr.bf16.mxu0 0
        %2055 = vmatpush2.bf16.msra.mxu0 0
        %2056 = vmatprep.mubr.bf16.mxu0 0
        %2057 = vmatmul.mubr.bf16.gmra.mxu0 %v1981
        %v2058 = vpop.f32.mrf.mxu0
        %v2059 = vadd.f32 0.0, %v2058
        %v2060 = vpop.f32.mrf.mxu0
        %v2061 = vadd.f32 0.0, %v2060
        %v2062 = vpop.f32.mrf.mxu0
        %v2063 = vpop.f32.mrf.mxu0
        %2064 = vdwg.mxu0
        %2065 = vmatprep.subr.bf16.mxu0 0
        %2066 = vmatpush1.bf16.msra.mxu0 0
        %2067 = vmatprep.subr.bf16.mxu0 0
        %2068 = vmatpush1.bf16.msra.mxu0 0
        %2069 = vmatprep.subr.bf16.mxu0 0
        %2070 = vmatpush1.bf16.msra.mxu0 0
        %2071 = vmatprep.subr.bf16.mxu0 0
        %2072 = vmatpush1.bf16.msra.mxu0 0
        %2073 = vmatprep.subr.bf16.mxu0 %v1968
        %2074 = vmatpush1.bf16.msra.mxu0 %v1967
        %2075 = vmatprep.subr.bf16.mxu0 %v1952
        %2076 = vmatpush1.bf16.msra.mxu0 %v1951
        %2077 = vmatprep.subr.bf16.mxu0 %v1936
        %2078 = vmatpush1.bf16.msra.mxu0 %v1935
        %2079 = vmatprep.subr.bf16.mxu0 %v1920
        %2080 = vmatpush1.bf16.msra.mxu0 %v1919
        %2081 = vmatprep.subr.bf16.mxu0 0
        %2082 = vmatpush2.bf16.msra.mxu0 0
        %2083 = vmatprep.subr.bf16.mxu0 0
        %2084 = vmatpush2.bf16.msra.mxu0 0
        %2085 = vmatprep.subr.bf16.mxu0 0
        %2086 = vmatpush2.bf16.msra.mxu0 0
        %2087 = vmatprep.subr.bf16.mxu0 0
        %2088 = vmatpush2.bf16.msra.mxu0 0
        %2089 = vmatprep.subr.bf16.mxu0 0
        %2090 = vmatpush2.bf16.msra.mxu0 0
        %2091 = vmatprep.subr.bf16.mxu0 0
        %2092 = vmatpush2.bf16.msra.mxu0 0
        %2093 = vmatprep.subr.bf16.mxu0 0
        %2094 = vmatpush2.bf16.msra.mxu0 0
        %2095 = vmatprep.subr.bf16.mxu0 0
        %2096 = vmatpush2.bf16.msra.mxu0 0
        %2097 = vmatprep.mubr.bf16.mxu0 0
        %2098 = vmatmul.mubr.bf16.gmra.mxu0 %v1981
        %v2099 = vpop.f32.mrf.mxu0
        %v2100 = vadd.f32 0.0, %v2099
        %v2101 = vpop.f32.mrf.mxu0
        %v2102 = vadd.f32 0.0, %v2101
        %v2103 = vpop.f32.mrf.mxu0
        %v2104 = vpop.f32.mrf.mxu0
        %2105 = vdwg.mxu0
        %2106 = vmatprep.subr.bf16.mxu0 0
        %2107 = vmatpush1.bf16.msra.mxu0 0
        %2108 = vmatprep.subr.bf16.mxu0 0
        %2109 = vmatpush1.bf16.msra.mxu0 0
        %2110 = vmatprep.subr.bf16.mxu0 0
        %2111 = vmatpush1.bf16.msra.mxu0 0
        %2112 = vmatprep.subr.bf16.mxu0 0
        %2113 = vmatpush1.bf16.msra.mxu0 0
        %2114 = vmatprep.subr.bf16.mxu0 %v1970
        %2115 = vmatpush1.bf16.msra.mxu0 %v1969
        %2116 = vmatprep.subr.bf16.mxu0 %v1954
        %2117 = vmatpush1.bf16.msra.mxu0 %v1953
        %2118 = vmatprep.subr.bf16.mxu0 %v1938
        %2119 = vmatpush1.bf16.msra.mxu0 %v1937
        %2120 = vmatprep.subr.bf16.mxu0 %v1922
        %2121 = vmatpush1.bf16.msra.mxu0 %v1921
        %2122 = vmatprep.subr.bf16.mxu0 0
        %2123 = vmatpush2.bf16.msra.mxu0 0
        %2124 = vmatprep.subr.bf16.mxu0 0
        %2125 = vmatpush2.bf16.msra.mxu0 0
        %2126 = vmatprep.subr.bf16.mxu0 0
        %2127 = vmatpush2.bf16.msra.mxu0 0
        %2128 = vmatprep.subr.bf16.mxu0 0
        %2129 = vmatpush2.bf16.msra.mxu0 0
        %2130 = vmatprep.subr.bf16.mxu0 0
        %2131 = vmatpush2.bf16.msra.mxu0 0
        %2132 = vmatprep.subr.bf16.mxu0 0
        %2133 = vmatpush2.bf16.msra.mxu0 0
        %2134 = vmatprep.subr.bf16.mxu0 0
        %2135 = vmatpush2.bf16.msra.mxu0 0
        %2136 = vmatprep.subr.bf16.mxu0 0
        %2137 = vmatpush2.bf16.msra.mxu0 0
        %2138 = vmatprep.mubr.bf16.mxu0 0
        %2139 = vmatmul.mubr.bf16.gmra.mxu0 %v1981
        %v2140 = vpop.f32.mrf.mxu0
        %v2141 = vadd.f32 0.0, %v2140
        %v2142 = vpop.f32.mrf.mxu0
        %v2143 = vadd.f32 0.0, %v2142
        %v2144 = vpop.f32.mrf.mxu0
        %v2145 = vpop.f32.mrf.mxu0
        %2146 = vdwg.mxu0
        %2147 = vmatprep.subr.bf16.mxu0 0
        %2148 = vmatpush1.bf16.msra.mxu0 0
        %2149 = vmatprep.subr.bf16.mxu0 0
        %2150 = vmatpush1.bf16.msra.mxu0 0
        %2151 = vmatprep.subr.bf16.mxu0 0
        %2152 = vmatpush1.bf16.msra.mxu0 0
        %2153 = vmatprep.subr.bf16.mxu0 0
        %2154 = vmatpush1.bf16.msra.mxu0 0
        %2155 = vmatprep.subr.bf16.mxu0 %v1972
        %2156 = vmatpush1.bf16.msra.mxu0 %v1971
        %2157 = vmatprep.subr.bf16.mxu0 %v1956
        %2158 = vmatpush1.bf16.msra.mxu0 %v1955
        %2159 = vmatprep.subr.bf16.mxu0 %v1940
        %2160 = vmatpush1.bf16.msra.mxu0 %v1939
        %2161 = vmatprep.subr.bf16.mxu0 %v1924
        %2162 = vmatpush1.bf16.msra.mxu0 %v1923
        %2163 = vmatprep.subr.bf16.mxu0 0
        %2164 = vmatpush2.bf16.msra.mxu0 0
        %2165 = vmatprep.subr.bf16.mxu0 0
        %2166 = vmatpush2.bf16.msra.mxu0 0
        %2167 = vmatprep.subr.bf16.mxu0 0
        %2168 = vmatpush2.bf16.msra.mxu0 0
        %2169 = vmatprep.subr.bf16.mxu0 0
        %2170 = vmatpush2.bf16.msra.mxu0 0
        %2171 = vmatprep.subr.bf16.mxu0 0
        %2172 = vmatpush2.bf16.msra.mxu0 0
        %2173 = vmatprep.subr.bf16.mxu0 0
        %2174 = vmatpush2.bf16.msra.mxu0 0
        %2175 = vmatprep.subr.bf16.mxu0 0
        %2176 = vmatpush2.bf16.msra.mxu0 0
        %2177 = vmatprep.subr.bf16.mxu0 0
        %2178 = vmatpush2.bf16.msra.mxu0 0
        %2179 = vmatprep.mubr.bf16.mxu0 0
        %2180 = vmatmul.mubr.bf16.gmra.mxu0 %v1981
        %v2181 = vpop.f32.mrf.mxu0
        %v2182 = vadd.f32 0.0, %v2181
        %v2183 = vpop.f32.mrf.mxu0
        %v2184 = vadd.f32 0.0, %v2183
        %v2185 = vpop.f32.mrf.mxu0
        %v2186 = vpop.f32.mrf.mxu0
        %2187 = vdwg.mxu0
        %2188 = vmatprep.subr.bf16.mxu0 0
        %2189 = vmatpush1.bf16.msra.mxu0 0
        %2190 = vmatprep.subr.bf16.mxu0 0
        %2191 = vmatpush1.bf16.msra.mxu0 0
        %2192 = vmatprep.subr.bf16.mxu0 0
        %2193 = vmatpush1.bf16.msra.mxu0 0
        %2194 = vmatprep.subr.bf16.mxu0 0
        %2195 = vmatpush1.bf16.msra.mxu0 0
        %2196 = vmatprep.subr.bf16.mxu0 %v1974
        %2197 = vmatpush1.bf16.msra.mxu0 %v1973
        %2198 = vmatprep.subr.bf16.mxu0 %v1958
        %2199 = vmatpush1.bf16.msra.mxu0 %v1957
        %2200 = vmatprep.subr.bf16.mxu0 %v1942
        %2201 = vmatpush1.bf16.msra.mxu0 %v1941
        %2202 = vmatprep.subr.bf16.mxu0 %v1926
        %2203 = vmatpush1.bf16.msra.mxu0 %v1925
        %2204 = vmatprep.subr.bf16.mxu0 0
        %2205 = vmatpush2.bf16.msra.mxu0 0
        %2206 = vmatprep.subr.bf16.mxu0 0
        %2207 = vmatpush2.bf16.msra.mxu0 0
        %2208 = vmatprep.subr.bf16.mxu0 0
        %2209 = vmatpush2.bf16.msra.mxu0 0
        %2210 = vmatprep.subr.bf16.mxu0 0
        %2211 = vmatpush2.bf16.msra.mxu0 0
        %2212 = vmatprep.subr.bf16.mxu0 0
        %2213 = vmatpush2.bf16.msra.mxu0 0
        %2214 = vmatprep.subr.bf16.mxu0 0
        %2215 = vmatpush2.bf16.msra.mxu0 0
        %2216 = vmatprep.subr.bf16.mxu0 0
        %2217 = vmatpush2.bf16.msra.mxu0 0
        %2218 = vmatprep.subr.bf16.mxu0 0
        %2219 = vmatpush2.bf16.msra.mxu0 0
        %2220 = vmatprep.mubr.bf16.mxu0 0
        %2221 = vmatmul.mubr.bf16.gmra.mxu0 %v1981
        %v2222 = vpop.f32.mrf.mxu0
        %v2223 = vadd.f32 0.0, %v2222
        %v2224 = vpop.f32.mrf.mxu0
        %v2225 = vadd.f32 0.0, %v2224
        %v2226 = vpop.f32.mrf.mxu0
        %v2227 = vpop.f32.mrf.mxu0
        %2228 = vdwg.mxu0
        %2229 = vmatprep.subr.bf16.mxu0 0
        %2230 = vmatpush1.bf16.msra.mxu0 0
        %2231 = vmatprep.subr.bf16.mxu0 0
        %2232 = vmatpush1.bf16.msra.mxu0 0
        %2233 = vmatprep.subr.bf16.mxu0 0
        %2234 = vmatpush1.bf16.msra.mxu0 0
        %2235 = vmatprep.subr.bf16.mxu0 0
        %2236 = vmatpush1.bf16.msra.mxu0 0
        %2237 = vmatprep.subr.bf16.mxu0 %v1976
        %2238 = vmatpush1.bf16.msra.mxu0 %v1975
        %2239 = vmatprep.subr.bf16.mxu0 %v1960
        %2240 = vmatpush1.bf16.msra.mxu0 %v1959
        %2241 = vmatprep.subr.bf16.mxu0 %v1944
        %2242 = vmatpush1.bf16.msra.mxu0 %v1943
        %2243 = vmatprep.subr.bf16.mxu0 %v1928
        %2244 = vmatpush1.bf16.msra.mxu0 %v1927
        %2245 = vmatprep.subr.bf16.mxu0 0
        %2246 = vmatpush2.bf16.msra.mxu0 0
        %2247 = vmatprep.subr.bf16.mxu0 0
        %2248 = vmatpush2.bf16.msra.mxu0 0
        %2249 = vmatprep.subr.bf16.mxu0 0
        %2250 = vmatpush2.bf16.msra.mxu0 0
        %2251 = vmatprep.subr.bf16.mxu0 0
        %2252 = vmatpush2.bf16.msra.mxu0 0
        %2253 = vmatprep.subr.bf16.mxu0 0
        %2254 = vmatpush2.bf16.msra.mxu0 0
        %2255 = vmatprep.subr.bf16.mxu0 0
        %2256 = vmatpush2.bf16.msra.mxu0 0
        %2257 = vmatprep.subr.bf16.mxu0 0
        %2258 = vmatpush2.bf16.msra.mxu0 0
        %2259 = vmatprep.subr.bf16.mxu0 0
        %2260 = vmatpush2.bf16.msra.mxu0 0
        %2261 = vmatprep.mubr.bf16.mxu0 0
        %2262 = vmatmul.mubr.bf16.gmra.mxu0 %v1981
        %v2263 = vpop.f32.mrf.mxu0
        %v2264 = vadd.f32 0.0, %v2263
        %v2265 = vpop.f32.mrf.mxu0
        %v2266 = vadd.f32 0.0, %v2265
        %v2267 = vpop.f32.mrf.mxu0
        %v2268 = vpop.f32.mrf.mxu0
        %2269 = vdwg.mxu0
        %2270 = vmatprep.subr.bf16.mxu0 0
        %2271 = vmatpush1.bf16.msra.mxu0 0
        %2272 = vmatprep.subr.bf16.mxu0 0
        %2273 = vmatpush1.bf16.msra.mxu0 0
        %2274 = vmatprep.subr.bf16.mxu0 0
        %2275 = vmatpush1.bf16.msra.mxu0 0
        %2276 = vmatprep.subr.bf16.mxu0 0
        %2277 = vmatpush1.bf16.msra.mxu0 0
        %2278 = vmatprep.subr.bf16.mxu0 %v1978
        %2279 = vmatpush1.bf16.msra.mxu0 %v1977
        %2280 = vmatprep.subr.bf16.mxu0 %v1962
        %2281 = vmatpush1.bf16.msra.mxu0 %v1961
        %2282 = vmatprep.subr.bf16.mxu0 %v1946
        %2283 = vmatpush1.bf16.msra.mxu0 %v1945
        %2284 = vmatprep.subr.bf16.mxu0 %v1930
        %2285 = vmatpush1.bf16.msra.mxu0 %v1929
        %2286 = vmatprep.subr.bf16.mxu0 0
        %2287 = vmatpush2.bf16.msra.mxu0 0
        %2288 = vmatprep.subr.bf16.mxu0 0
        %2289 = vmatpush2.bf16.msra.mxu0 0
        %2290 = vmatprep.subr.bf16.mxu0 0
        %2291 = vmatpush2.bf16.msra.mxu0 0
        %2292 = vmatprep.subr.bf16.mxu0 0
        %2293 = vmatpush2.bf16.msra.mxu0 0
        %2294 = vmatprep.subr.bf16.mxu0 0
        %2295 = vmatpush2.bf16.msra.mxu0 0
        %2296 = vmatprep.subr.bf16.mxu0 0
        %2297 = vmatpush2.bf16.msra.mxu0 0
        %2298 = vmatprep.subr.bf16.mxu0 0
        %2299 = vmatpush2.bf16.msra.mxu0 0
        %2300 = vmatprep.subr.bf16.mxu0 0
        %2301 = vmatpush2.bf16.msra.mxu0 0
        %2302 = vmatprep.mubr.bf16.mxu0 0
        %2303 = vmatmul.mubr.bf16.gmra.mxu0 %v1981
        %v2304 = vpop.f32.mrf.mxu0
        %v2305 = vadd.f32 0.0, %v2304
        %v2306 = vpop.f32.mrf.mxu0
        %v2307 = vadd.f32 0.0, %v2306
        %v2308 = vpop.f32.mrf.mxu0
        %v2309 = vpop.f32.mrf.mxu0
        %2310 = vdwg.mxu0
        %v2327 = vcombine.low %v2018, %v2020
        %v2328 = vcombine.low %v2059, %v2061
        %v2329 = vcombine.low %v2100, %v2102
        %v2330 = vcombine.low %v2141, %v2143
        %v2332 = vunpack.c.l.s4 1966171168
        %v2333 = vunpack.c.0.s8 %v2332
        %v2334 = vlaneseq
        %v2335 = vshrl.u32 %v2334, 7
        %v2336 = vsub.s32 %v2333, %v2335
        %v2337 = vrot.slane %v2327, %v2336
        %v2339 = vunpack.c.l.s4 1966171168
        %v2340 = vunpack.c.0.s8 %v2339
        %v2341 = vlaneseq
        %v2342 = vshrl.u32 %v2341, 7
        %v2343 = vsub.s32 %v2340, %v2342
        %v2344 = vrot.slane %v2328, %v2343
        %v2346 = vunpack.c.l.s4 1966171168
        %v2347 = vunpack.c.0.s8 %v2346
        %v2348 = vlaneseq
        %v2349 = vshrl.u32 %v2348, 7
        %v2350 = vsub.s32 %v2347, %v2349
        %v2351 = vrot.slane %v2329, %v2350
        %v2353 = vunpack.c.l.s4 1966171168
        %v2354 = vunpack.c.0.s8 %v2353
        %v2355 = vlaneseq
        %v2356 = vshrl.u32 %v2355, 7
        %v2357 = vsub.s32 %v2354, %v2356
        %v2358 = vrot.slane %v2330, %v2357
        %v2359 = vcombine.low %v2337, %v2344
        %v2360 = vcombine.low %v2351, %v2358
        %v2362 = vunpack.c.l.s4 1966171168
        %v2363 = vunpack.c.0.s8 %v2362
        %v2364 = vlaneseq
        %v2365 = vshrl.u32 %v2364, 7
        %v2366 = vsub.s32 %v2363, %v2365
        %v2367 = vrot.slane %v2359, %v2366
        %v2369 = vunpack.c.l.s4 1966171168
        %v2370 = vunpack.c.0.s8 %v2369
        %v2371 = vlaneseq
        %v2372 = vshrl.u32 %v2371, 7
        %v2373 = vsub.s32 %v2370, %v2372
        %v2374 = vrot.slane %v2360, %v2373
        %v2375 = vcombine.low %v2367, %v2374
        %v2376 = vcombine.low %v2182, %v2184
        %v2377 = vcombine.low %v2223, %v2225
        %v2378 = vcombine.low %v2264, %v2266
        %v2379 = vcombine.low %v2305, %v2307
        %v2381 = vunpack.c.l.s4 1966171168
        %v2382 = vunpack.c.0.s8 %v2381
        %v2383 = vlaneseq
        %v2384 = vshrl.u32 %v2383, 7
        %v2385 = vsub.s32 %v2382, %v2384
        %v2386 = vrot.slane %v2376, %v2385
        %v2388 = vunpack.c.l.s4 1966171168
        %v2389 = vunpack.c.0.s8 %v2388
        %v2390 = vlaneseq
        %v2391 = vshrl.u32 %v2390, 7
        %v2392 = vsub.s32 %v2389, %v2391
        %v2393 = vrot.slane %v2377, %v2392
        %v2395 = vunpack.c.l.s4 1966171168
        %v2396 = vunpack.c.0.s8 %v2395
        %v2397 = vlaneseq
        %v2398 = vshrl.u32 %v2397, 7
        %v2399 = vsub.s32 %v2396, %v2398
        %v2400 = vrot.slane %v2378, %v2399
        %v2402 = vunpack.c.l.s4 1966171168
        %v2403 = vunpack.c.0.s8 %v2402
        %v2404 = vlaneseq
        %v2405 = vshrl.u32 %v2404, 7
        %v2406 = vsub.s32 %v2403, %v2405
        %v2407 = vrot.slane %v2379, %v2406
        %v2408 = vcombine.low %v2386, %v2393
        %v2409 = vcombine.low %v2400, %v2407
        %v2411 = vunpack.c.l.s4 1966171168
        %v2412 = vunpack.c.0.s8 %v2411
        %v2413 = vlaneseq
        %v2414 = vshrl.u32 %v2413, 7
        %v2415 = vsub.s32 %v2412, %v2414
        %v2416 = vrot.slane %v2408, %v2415
        %v2418 = vunpack.c.l.s4 1966171168
        %v2419 = vunpack.c.0.s8 %v2418
        %v2420 = vlaneseq
        %v2421 = vshrl.u32 %v2420, 7
        %v2422 = vsub.s32 %v2419, %v2421
        %v2423 = vrot.slane %v2409, %v2422
        %v2424 = vcombine.low %v2416, %v2423
        %2427 = vst [vmem:[%s245] sm:$0xff] %v2375
        %2428 = vst [vmem:[%s245 + $0x8] sm:$0xff] %v2424
        %s2429 = sand.u32 %s115, 1
        %s2430 = scalar_lea.sflag [#allocation4], %s2429
        %s2431 = sand.u32 %s115, 1
        %s2432 = smul.addr %s2431, 16
        %s2433 = scalar_lea.vmem [#allocation3], %s2432
        // Predicated region
        $region60: #{_lambda_.1} parent=54 // pred_check
          %p2434 = pneg %p125
        $region61: #{_lambda_.1} parent=54 // pred_check_branch
          %2436 = sbr.rel (%p2434) target = $region63
        $region62: #{_lambda_.1} parent=54 // pred_region
          %s2437 = smul.u32 16, %s18
          %s2439 = ssub.s32 256, 256
          %2440 = vsyncadd %s2430, %s2439
          %s2441 = smul.addr %s2437, 16
          %s2442 = scalar_lea.hbm %s4, %s2441
          %s2444 = sshll.u32 %s2433, 4
          %s2445 = int_to_ptr.vmem [resolvable:$true] %s2444
          %2447 = dma.vmem_to_hbm [thread:$0]  %s2445, 256, %s2442, %s2430
        $region63: #{_lambda_.1} parent=54 // pred_fallthru
          _
      $region55: #{_lambda_.1} parent=5 // pred_fallthru
        _
      %p2448 = scmp.le.s32.totalorder 2, %s13
      // Predicated region
      $region64: #{_lambda_.1} parent=5 // pred_check
        %p2449 = pneg %p2448
      $region65: #{_lambda_.1} parent=5 // pred_check_branch
        %2451 = sbr.rel (%p2449) target = $region67
      $region66: #{_lambda_.1} parent=5 // pred_region
        %s2452 = ssub.s32 %s13, 2
        // Predicated region
        $region68: #{_lambda_.1} parent=66 // pred_check
          %p2453 = pneg %p131
        $region69: #{_lambda_.1} parent=66 // pred_check_branch
          %2455 = sbr.rel (%p2453) target = $region71
        $region70: #{_lambda_.1} parent=66 // pred_region
          %s2456 = sand.u32 %s116, 1
          %s2457 = scalar_lea.sflag [#allocation4], %s2456
          %s2458 = sand.u32 %s116, 1
          %s2459 = smul.addr %s2458, 16
          %s2460 = scalar_lea.vmem [#allocation3], %s2459
          %2461 = dma.done %s2457, 256
        $region71: #{_lambda_.1} parent=66 // pred_fallthru
          _
      $region67: #{_lambda_.1} parent=5 // pred_fallthru
        _
    $region6: #{_lambda_.1} parent=1 // loop_footer
      %s17 = sadd.s32 1, %s13
    $region7: #{_lambda_.1} parent=1 // loop_footer_branch
      %12 = sbr.rel target = $region3
    $region8: #{_lambda_.1} parent=1 // loop_exit
      _
    %2462 = vsyncpa [#allocation4], 1
    %s2463 = scalar_lea.sflag [#allocation4], 1
    %2464 = vsyncpa %s2463, 1

</llo_original>
